<compile_context>
chip_gen: v7x
topology: tpu7x:2x2x1
jax: 0.10.0
libtpu: 0.0.40
codegen_flags: <defaults>
</compile_context>

<pallas_src>
import functools

import jax
import jax.numpy as jnp
from jax import lax
from jax.experimental import pallas as pl
from jax.experimental.pallas import tpu as pltpu

EPS = 1e-5                      # BatchNorm2d default eps
VMEM_LIMIT = 32 * 1024 * 1024   # explicit scoped-VMEM budget (fits v5e/v6e/v7x)


def _cparams():
    return pltpu.CompilerParams(dimension_semantics=("parallel",),
                                vmem_limit_bytes=VMEM_LIMIT)


def _tap_offsets(wp):
    """Flat-index offsets of the 9 conv taps in a (H+2, W+2) padded image."""
    return tuple((dy - 1) * wp + (dx - 1) for dy in range(3) for dx in range(3))


def _conv_weight_mat(w_oihw):
    """PyTorch (O, I, 3, 3) conv weight -> (O, 9*I), columns ordered (dy, dx, ci)."""
    o, i, kh, kw = w_oihw.shape
    return jnp.transpose(w_oihw, (0, 2, 3, 1)).reshape(o, kh * kw * i)


def _interior_mask(h, w):
    """(1, (h+2)*(w+2)) float mask: 1.0 at interior pixels, 0.0 on the pad ring."""
    m = jnp.zeros((h + 2, w + 2), jnp.float32)
    m = m.at[1:h + 1, 1:w + 1].set(1.0)
    return m.reshape(1, (h + 2) * (w + 2))


# ------------------------------ Pallas kernels ------------------------------ #

def _conv_im2col(x, p_ref, w, b, interior, offsets):
    """3x3 'same' conv of one image held as (Cin, L) in padded-flat layout.

    Builds the (9*Cin, L) patch matrix in a VMEM scratch from 9 statically
    shifted slab copies, does ONE MXU matmul with the spatial axis on lanes,
    adds bias and zeroes the padding ring.  Stale scratch columns at the two
    ends only ever land on non-interior outputs, which jnp.where discards.
    """
    cin, L = x.shape
    for t, off in enumerate(offsets):
        r = t * cin
        if off >= 0:
            p_ref[r:r + cin, 0:L - off] = x[:, off:L]
        else:
            p_ref[r:r + cin, -off:L] = x[:, 0:L + off]
    acc = jnp.dot(w, p_ref[0:9 * cin, :], preferred_element_type=jnp.float32)
    return jnp.where(interior, acc + b, 0.0)


def _conv1_kernel(x_ref, w_ref, b_ref, m_ref, y_ref, st_ref, p_ref, *, offsets):
    """conv1 for one image; also emits per-image BN1 (sum, sumsq) over interior."""
    interior = m_ref[...] > 0.5
    y = _conv_im2col(x_ref[0], p_ref, w_ref[...], b_ref[...], interior, offsets)
    st_ref[0, :, 0:1] = jnp.sum(y, axis=1, keepdims=True)
    st_ref[0, :, 1:2] = jnp.sum(y * y, axis=1, keepdims=True)
    y_ref[0] = y


def _conv23_kernel(x_ref, w2_ref, b2_ref, w3_ref, b3_ref, m_ref,
                   y_ref, st_ref, p2_ref, p3_ref, *, offsets):
    """Fused conv2+relu2+conv3 for one image (y2 stays in VMEM) + BN3 stats."""
    interior = m_ref[...] > 0.5
    y2 = _conv_im2col(x_ref[0], p2_ref, w2_ref[...], b2_ref[...], interior, offsets)
    y2 = jnp.maximum(y2, 0.0)                                   # relu2
    y3 = _conv_im2col(y2, p3_ref, w3_ref[...], b3_ref[...], interior, offsets)
    st_ref[0, :, 0:1] = jnp.sum(y3, axis=1, keepdims=True)
    st_ref[0, :, 1:2] = jnp.sum(y3 * y3, axis=1, keepdims=True)
    y_ref[0] = y3


def _bn_relu_fc_kernel(y_ref, sc_ref, sh_ref, wf_ref, o_ref):
    """Folded BN3 + ReLU fused with the final Linear.

    One lane-axis reduction per image; the FC weight is already permuted into
    the padded-flat layout (zeros on the pad ring), so junk on the ring is
    multiplied by zero.
    """
    a = jnp.maximum(y_ref[0] * sc_ref[...] + sh_ref[...], 0.0)   # (C, L)
    o_ref[0] = jnp.sum(a * wf_ref[...], axis=1, keepdims=True)   # (C, 1)


# ------------------------------ layer wrappers ------------------------------ #

def conv_first(xpf, wmat, bias, mask, wp):
    """conv1 over padded-flat input (N, Cin, L); returns (y, per-image stats)."""
    n, cin, L = xpf.shape
    cout = wmat.shape[0]
    kernel = functools.partial(_conv1_kernel, offsets=_tap_offsets(wp))
    flops = 2 * n * L * 9 * cin * cout
    bytes_acc = 4 * (n * cin * L + n * cout * L + 9 * cin * cout
                     + n * cout * 2 + L)
    return pl.pallas_call(
        kernel,
        grid=(n,),
        in_specs=[
            pl.BlockSpec((1, cin, L), lambda i: (i, 0, 0)),
            pl.BlockSpec((cout, 9 * cin), lambda i: (0, 0)),
            pl.BlockSpec((cout, 1), lambda i: (0, 0)),
            pl.BlockSpec((1, L), lambda i: (0, 0)),
        ],
        out_specs=(
            pl.BlockSpec((1, cout, L), lambda i: (i, 0, 0)),
            pl.BlockSpec((1, cout, 2), lambda i: (i, 0, 0)),
        ),
        out_shape=(
            jax.ShapeDtypeStruct((n, cout, L), jnp.float32),
            jax.ShapeDtypeStruct((n, cout, 2), jnp.float32),
        ),
        scratch_shapes=[pltpu.VMEM((9 * cin, L), jnp.float32)],
        compiler_params=_cparams(),
        cost_estimate=pl.CostEstimate(flops=flops, transcendentals=0,
                                      bytes_accessed=bytes_acc),
    )(xpf, wmat, bias, mask)


def conv2_conv3(p1f, w2m, b2, w3m, b3, mask, wp):
    """Fused conv2+relu2+conv3 over padded-flat (N, 12, L2); returns (y3, stats3)."""
    n, c1, L = p1f.shape
    c2 = w2m.shape[0]
    c3 = w3m.shape[0]
    kernel = functools.partial(_conv23_kernel, offsets=_tap_offsets(wp))
    flops = 2 * n * L * 9 * (c1 * c2 + c2 * c3)
    bytes_acc = 4 * (n * c1 * L + n * c3 * L + 9 * (c1 * c2 + c2 * c3)
                     + n * c3 * 2 + L)
    return pl.pallas_call(
        kernel,
        grid=(n,),
        in_specs=[
            pl.BlockSpec((1, c1, L), lambda i: (i, 0, 0)),
            pl.BlockSpec((c2, 9 * c1), lambda i: (0, 0)),
            pl.BlockSpec((c2, 1), lambda i: (0, 0)),
            pl.BlockSpec((c3, 9 * c2), lambda i: (0, 0)),
            pl.BlockSpec((c3, 1), lambda i: (0, 0)),
            pl.BlockSpec((1, L), lambda i: (0, 0)),
        ],
        out_specs=(
            pl.BlockSpec((1, c3, L), lambda i: (i, 0, 0)),
            pl.BlockSpec((1, c3, 2), lambda i: (i, 0, 0)),
        ),
        out_shape=(
            jax.ShapeDtypeStruct((n, c3, L), jnp.float32),
            jax.ShapeDtypeStruct((n, c3, 2), jnp.float32),
        ),
        scratch_shapes=[pltpu.VMEM((9 * c1, L), jnp.float32),
                        pltpu.VMEM((9 * c2, L), jnp.float32)],
        compiler_params=_cparams(),
        cost_estimate=pl.CostEstimate(flops=flops, transcendentals=0,
                                      bytes_accessed=bytes_acc),
    )(p1f, w2m, b2, w3m, b3, mask)


def bn_relu_fc(y3, scale, shift, wf_flat):
    """bn3 + relu3 + flatten + Linear; emits per-image per-channel partials."""
    n, c, L = y3.shape
    return pl.pallas_call(
        _bn_relu_fc_kernel,
        grid=(n,),
        in_specs=[
            pl.BlockSpec((1, c, L), lambda i: (i, 0, 0)),
            pl.BlockSpec((c, 1), lambda i: (0, 0)),
            pl.BlockSpec((c, 1), lambda i: (0, 0)),
            pl.BlockSpec((c, L), lambda i: (0, 0)),
        ],
        out_specs=pl.BlockSpec((1, c, 1), lambda i: (i, 0, 0)),
        out_shape=jax.ShapeDtypeStruct((n, c, 1), jnp.float32),
        compiler_params=_cparams(),
        cost_estimate=pl.CostEstimate(
            flops=4 * n * c * L, transcendentals=0,
            bytes_accessed=4 * (n * c * L + c * L + n * c + 2 * c)),
    )(y3, scale, shift, wf_flat)


def _finalize_bn(stats, gamma, beta, count):
    """Fold per-image (sum, sumsq) into training-mode BN (scale, shift).

    Uses biased variance (PyTorch forward semantics) with a clamp at 0 to guard
    the E[x^2]-E[x]^2 cancellation.
    """
    tot = jnp.sum(stats, axis=0)                   # (C, 2): [sum, sumsq]
    mean = tot[:, 0] / count
    var = jnp.maximum(tot[:, 1] / count - mean * mean, 0.0)
    scale = gamma * lax.rsqrt(var + EPS)
    shift = beta - mean * scale
    return scale, shift


# -------------------------------- full model -------------------------------- #

def init_params(key, final_size):
    ks = jax.random.split(key, 8)
    p = {}
    p["w1"] = 0.05 * jax.random.normal(ks[0], (12, 3, 3, 3), jnp.float32)
    p["b1"] = 0.05 * jax.random.normal(ks[1], (12,), jnp.float32)
    p["g1"] = jnp.ones((12,), jnp.float32)         # BatchNorm2d default init
    p["beta1"] = jnp.zeros((12,), jnp.float32)
    p["w2"] = 0.05 * jax.random.normal(ks[2], (20, 12, 3, 3), jnp.float32)
    p["b2"] = 0.05 * jax.random.normal(ks[3], (20,), jnp.float32)
    p["w3"] = 0.05 * jax.random.normal(ks[4], (32, 20, 3, 3), jnp.float32)
    p["b3"] = 0.05 * jax.random.normal(ks[5], (32,), jnp.float32)
    p["g3"] = jnp.ones((32,), jnp.float32)
    p["beta3"] = jnp.zeros((32,), jnp.float32)
    p["wf"] = 0.05 * jax.random.normal(ks[6], (1, final_size), jnp.float32)
    p["bf"] = 0.05 * jax.random.normal(ks[7], (1,), jnp.float32)
    return p


def dog_model_forward(x_nchw, p):
    n, cin, h, w = x_nchw.shape
    assert h % 2 == 0 and w % 2 == 0, "MaxPool2d(2) needs even spatial dims"
    c1, c3 = p["w1"].shape[0], p["w3"].shape[0]
    hd, wd = h // 2, w // 2
    L1 = (h + 2) * (w + 2)
    L2 = (hd + 2) * (wd + 2)

    # Pre-pad + flatten the input once (XLA glue): channels-major padded-flat.
    xpf = jnp.pad(x_nchw, ((0, 0), (0, 0), (1, 1), (1, 1))).reshape(n, cin, L1)
    mask1 = _interior_mask(h, w)
    mask2 = _interior_mask(hd, wd)

    # conv1 (Pallas) + per-image BN1 partial stats.
    y1, st1 = conv_first(xpf, _conv_weight_mat(p["w1"]),
                         p["b1"].reshape(-1, 1), mask1, w + 2)

    # bn1 finalize/apply + relu1 + 2x2 maxpool + re-pad (tiny mem-bound XLA glue).
    # TODO(synk): fuse this re-pitch into the conv2/conv3 kernel via strided
    # VMEM reads to drop the p1 HBM round-trip.
    sc1, sh1 = _finalize_bn(st1, p["g1"], p["beta1"], n * h * w)
    y1i = y1.reshape(n, c1, h + 2, w + 2)[:, :, 1:h + 1, 1:w + 1]
    a1 = jnp.maximum(y1i * sc1[None, :, None, None] + sh1[None, :, None, None], 0.0)
    p1 = lax.reduce_window(a1, -jnp.inf, lax.max,
                           (1, 1, 2, 2), (1, 1, 2, 2), "VALID")
    p1f = jnp.pad(p1, ((0, 0), (0, 0), (1, 1), (1, 1))).reshape(n, c1, L2)

    # conv2 + relu2 + conv3 (+ BN3 stats) fused per image: y2 never leaves VMEM.
    y3, st3 = conv2_conv3(p1f, _conv_weight_mat(p["w2"]), p["b2"].reshape(-1, 1),
                          _conv_weight_mat(p["w3"]), p["b3"].reshape(-1, 1),
                          mask2, wd + 2)

    # bn3 finalize (XLA), then bn3 + relu3 + flatten + fc fused (Pallas).
    sc3, sh3 = _finalize_bn(st3, p["g3"], p["beta3"], n * hd * wd)
    # PyTorch flattens NCHW: index = c*hd*wd + y*wd + x -> permute the FC weight
    # once into the padded-flat layout (zeros on the pad ring).
    wf_flat = jnp.pad(p["wf"].reshape(c3, hd, wd),
                      ((0, 0), (1, 1), (1, 1))).reshape(c3, L2)
    part = bn_relu_fc(y3, sc3.reshape(-1, 1), sh3.reshape(-1, 1), wf_flat)
    return jnp.sum(part[:, :, 0], axis=1, keepdims=True) + p["bf"].reshape(1, 1)


# --------------------------- pure-JAX reference ----------------------------- #

def _ref_forward(x_nchw, p):
    x = jnp.transpose(x_nchw, (0, 2, 3, 1))

    def conv(y, w, b):
        return lax.conv_general_dilated(
            y, jnp.transpose(w, (2, 3, 1, 0)), (1, 1), "SAME",
            dimension_numbers=("NHWC", "HWIO", "NHWC")) + b

    def bn(y, g, beta):
        m = jnp.mean(y, axis=(0, 1, 2))
        v = jnp.mean((y - m) ** 2, axis=(0, 1, 2))
        return (y - m) * lax.rsqrt(v + EPS) * g + beta

    y = jnp.maximum(bn(conv(x, p["w1"], p["b1"]), p["g1"], p["beta1"]), 0.0)
    y = lax.reduce_window(y, -jnp.inf, lax.max,
                          (1, 2, 2, 1), (1, 2, 2, 1), "VALID")
    y = jnp.maximum(conv(y, p["w2"], p["b2"]), 0.0)
    y = jnp.maximum(bn(conv(y, p["w3"], p["b3"]), p["g3"], p["beta3"]), 0.0)
    feat = jnp.transpose(y, (0, 3, 1, 2)).reshape(x_nchw.shape[0], -1)
    return feat @ p["wf"].T + p["bf"]


if __name__ == "__main__":
    key = jax.random.PRNGKey(0)
    kx, kp = jax.random.split(key)
    N, H, W = 2, 16, 16
    # Original module hardcodes FINAL_SIZE = 32*75*75 (150x150 inputs); here we
    # use the same formula 32*(H//2)*(W//2) at a small spatial size.
    final_size = 32 * (H // 2) * (W // 2)

    x = jax.random.normal(kx, (N, 3, H, W), jnp.float32)   # NCHW like PyTorch
    params = init_params(kp, final_size)

    fwd = jax.jit(dog_model_forward)
    out = jax.block_until_ready(fwd(x, params))
    assert out.shape == (N, 1), out.shape

    ref = _ref_forward(x, params)
    assert jnp.allclose(out, ref, atol=5e-2, rtol=5e-2), (out, ref)
    print("KERNEL_OK")
</pallas_src>

<mosaic_0001>
module attributes {stable_mosaic.version = 11 : i64} {
  func.func @_conv1_kernel(%arg0: i32, %arg1: memref<1x3x324xf32, #tpu.memory_space<vmem>>, %arg2: memref<12x27xf32, #tpu.memory_space<vmem>>, %arg3: memref<12x1xf32, #tpu.memory_space<vmem>>, %arg4: memref<1x324xf32, #tpu.memory_space<vmem>>, %arg5: memref<1x12x324xf32, #tpu.memory_space<vmem>>, %arg6: memref<1x12x2xf32, #tpu.memory_space<vmem>>, %arg7: memref<27x324xf32, #tpu.memory_space<vmem>>) attributes {dimension_semantics = [#tpu.dimension_semantics<parallel>], iteration_bounds = array<i64: 2>, scalar_prefetch = 0 : i64, scratch_operands = 1 : i64, tpu.core_type = #tpu.core_type<tc>, window_params = [{transform_indices = @transform_0, window_bounds = array<i64: 1, 3, 324>}, {pipeline_mode = #tpu.pipeline_mode<synchronous>, transform_indices = @transform_1, window_bounds = array<i64: 12, 27>}, {pipeline_mode = #tpu.pipeline_mode<synchronous>, transform_indices = @transform_2, window_bounds = array<i64: 12, 1>}, {pipeline_mode = #tpu.pipeline_mode<synchronous>, transform_indices = @transform_3, window_bounds = array<i64: 1, 324>}, {transform_indices = @transform_4, window_bounds = array<i64: 1, 12, 324>}, {transform_indices = @transform_5, window_bounds = array<i64: 1, 12, 2>}]} {
    %c0 = arith.constant 0 : index
    %c0_0 = arith.constant 0 : index
    %0 = vector.load %arg4[%c0, %c0_0] : memref<1x324xf32, #tpu.memory_space<vmem>>, vector<1x324xf32>
    %cst = arith.constant 5.000000e-01 : f32
    %1 = vector.broadcast %cst : f32 to vector<1x324xf32>
    %2 = arith.cmpf ogt, %0, %1 : vector<1x324xf32>
    %c0_1 = arith.constant 0 : index
    %c0_2 = arith.constant 0 : index
    %c0_3 = arith.constant 0 : index
    %3 = vector.load %arg1[%c0_1, %c0_2, %c0_3] : memref<1x3x324xf32, #tpu.memory_space<vmem>>, vector<1x3x324xf32>
    %4 = vector.shape_cast %3 : vector<1x3x324xf32> to vector<3x324xf32>
    %c0_4 = arith.constant 0 : index
    %c0_5 = arith.constant 0 : index
    %5 = vector.load %arg2[%c0_4, %c0_5] : memref<12x27xf32, #tpu.memory_space<vmem>>, vector<12x27xf32>
    %c0_6 = arith.constant 0 : index
    %c0_7 = arith.constant 0 : index
    %6 = vector.load %arg3[%c0_6, %c0_7] : memref<12x1xf32, #tpu.memory_space<vmem>>, vector<12x1xf32>
    %7 = vector.extract_strided_slice %4 {offsets = [0, 0], sizes = [3, 305], strides = [1, 1]} : vector<3x324xf32> to vector<3x305xf32>
    %c0_8 = arith.constant 0 : index
    %c19 = arith.constant 19 : index
    %8 = vector.load %arg7[%c0_8, %c19] : memref<27x324xf32, #tpu.memory_space<vmem>>, vector<3x305xf32>
    tpu.vector_store %arg7[%c0_8, %c19], %7 {strides = array<i32>} : memref<27x324xf32, #tpu.memory_space<vmem>>, vector<3x305xf32>,
    %9 = vector.extract_strided_slice %4 {offsets = [0, 0], sizes = [3, 306], strides = [1, 1]} : vector<3x324xf32> to vector<3x306xf32>
    %c3 = arith.constant 3 : index
    %c18 = arith.constant 18 : index
    %10 = vector.load %arg7[%c3, %c18] : memref<27x324xf32, #tpu.memory_space<vmem>>, vector<3x306xf32>
    tpu.vector_store %arg7[%c3, %c18], %9 {strides = array<i32>} : memref<27x324xf32, #tpu.memory_space<vmem>>, vector<3x306xf32>,
    %11 = vector.extract_strided_slice %4 {offsets = [0, 0], sizes = [3, 307], strides = [1, 1]} : vector<3x324xf32> to vector<3x307xf32>
    %c6 = arith.constant 6 : index
    %c17 = arith.constant 17 : index
    %12 = vector.load %arg7[%c6, %c17] : memref<27x324xf32, #tpu.memory_space<vmem>>, vector<3x307xf32>
    tpu.vector_store %arg7[%c6, %c17], %11 {strides = array<i32>} : memref<27x324xf32, #tpu.memory_space<vmem>>, vector<3x307xf32>,
    %13 = vector.extract_strided_slice %4 {offsets = [0, 0], sizes = [3, 323], strides = [1, 1]} : vector<3x324xf32> to vector<3x323xf32>
    %c9 = arith.constant 9 : index
    %c1 = arith.constant 1 : index
    %14 = vector.load %arg7[%c9, %c1] : memref<27x324xf32, #tpu.memory_space<vmem>>, vector<3x323xf32>
    tpu.vector_store %arg7[%c9, %c1], %13 {strides = array<i32>} : memref<27x324xf32, #tpu.memory_space<vmem>>, vector<3x323xf32>,
    %c12 = arith.constant 12 : index
    %c0_9 = arith.constant 0 : index
    %15 = vector.load %arg7[%c12, %c0_9] : memref<27x324xf32, #tpu.memory_space<vmem>>, vector<3x324xf32>
    tpu.vector_store %arg7[%c12, %c0_9], %4 {strides = array<i32>} : memref<27x324xf32, #tpu.memory_space<vmem>>, vector<3x324xf32>,
    %16 = vector.extract_strided_slice %4 {offsets = [0, 1], sizes = [3, 323], strides = [1, 1]} : vector<3x324xf32> to vector<3x323xf32>
    %c15 = arith.constant 15 : index
    %c0_10 = arith.constant 0 : index
    %17 = vector.load %arg7[%c15, %c0_10] : memref<27x324xf32, #tpu.memory_space<vmem>>, vector<3x323xf32>
    tpu.vector_store %arg7[%c15, %c0_10], %16 {strides = array<i32>} : memref<27x324xf32, #tpu.memory_space<vmem>>, vector<3x323xf32>,
    %18 = vector.extract_strided_slice %4 {offsets = [0, 17], sizes = [3, 307], strides = [1, 1]} : vector<3x324xf32> to vector<3x307xf32>
    %c18_11 = arith.constant 18 : index
    %c0_12 = arith.constant 0 : index
    %19 = vector.load %arg7[%c18_11, %c0_12] : memref<27x324xf32, #tpu.memory_space<vmem>>, vector<3x307xf32>
    tpu.vector_store %arg7[%c18_11, %c0_12], %18 {strides = array<i32>} : memref<27x324xf32, #tpu.memory_space<vmem>>, vector<3x307xf32>,
    %20 = vector.extract_strided_slice %4 {offsets = [0, 18], sizes = [3, 306], strides = [1, 1]} : vector<3x324xf32> to vector<3x306xf32>
    %c21 = arith.constant 21 : index
    %c0_13 = arith.constant 0 : index
    %21 = vector.load %arg7[%c21, %c0_13] : memref<27x324xf32, #tpu.memory_space<vmem>>, vector<3x306xf32>
    tpu.vector_store %arg7[%c21, %c0_13], %20 {strides = array<i32>} : memref<27x324xf32, #tpu.memory_space<vmem>>, vector<3x306xf32>,
    %22 = vector.extract_strided_slice %4 {offsets = [0, 19], sizes = [3, 305], strides = [1, 1]} : vector<3x324xf32> to vector<3x305xf32>
    %c24 = arith.constant 24 : index
    %c0_14 = arith.constant 0 : index
    %23 = vector.load %arg7[%c24, %c0_14] : memref<27x324xf32, #tpu.memory_space<vmem>>, vector<3x305xf32>
    tpu.vector_store %arg7[%c24, %c0_14], %22 {strides = array<i32>} : memref<27x324xf32, #tpu.memory_space<vmem>>, vector<3x305xf32>,
    %c0_15 = arith.constant 0 : index
    %c0_16 = arith.constant 0 : index
    %24 = vector.load %arg7[%c0_15, %c0_16] : memref<27x324xf32, #tpu.memory_space<vmem>>, vector<27x324xf32>
    %cst_17 = arith.constant dense<0.000000e+00> : vector<12x324xf32>
    %25 = tpu.matmul %5, %24, %cst_17 {dimension_numbers = #tpu.dot_dimension_numbers<[1], [0], [0], [1], [0, 0, 1, 1], [], []>} : vector<12x27xf32>, vector<27x324xf32>, vector<12x324xf32> -> vector<12x324xf32>
    %26 = vector.broadcast %6 : vector<12x1xf32> to vector<12x324xf32>
    %27 = arith.addf %25, %26 : vector<12x324xf32>
    %cst_18 = arith.constant 0.000000e+00 : f32
    %28 = vector.shape_cast %2 : vector<1x324xi1> to vector<1x324xi1>
    %29 = vector.broadcast %28 : vector<1x324xi1> to vector<12x324xi1>
    %30 = vector.broadcast %cst_18 : f32 to vector<12x324xf32>
    %31 = arith.select %29, %27, %30 : vector<12x324xi1>, vector<12x324xf32>
    %cst_19 = arith.constant dense<0.000000e+00> : vector<12xf32>
    %32 = vector.multi_reduction <add>, %31, %cst_19 [1] : vector<12x324xf32> to vector<12xf32>
    %33 = vector.shape_cast %32 : vector<12xf32> to vector<12x1xf32>
    %c0_20 = arith.constant 0 : index
    %c0_21 = arith.constant 0 : index
    %c0_22 = arith.constant 0 : index
    %34 = vector.load %arg6[%c0_20, %c0_21, %c0_22] : memref<1x12x2xf32, #tpu.memory_space<vmem>>, vector<1x12x1xf32>
    %35 = vector.shape_cast %34 : vector<1x12x1xf32> to vector<12x1xf32>
    %36 = vector.shape_cast %33 : vector<12x1xf32> to vector<1x12x1xf32>
    tpu.vector_store %arg6[%c0_20, %c0_21, %c0_22], %36 {strides = array<i32>} : memref<1x12x2xf32, #tpu.memory_space<vmem>>, vector<1x12x1xf32>,
    %37 = arith.mulf %31, %31 : vector<12x324xf32>
    %cst_23 = arith.constant dense<0.000000e+00> : vector<12xf32>
    %38 = vector.multi_reduction <add>, %37, %cst_23 [1] : vector<12x324xf32> to vector<12xf32>
    %39 = vector.shape_cast %38 : vector<12xf32> to vector<12x1xf32>
    %c0_24 = arith.constant 0 : index
    %c0_25 = arith.constant 0 : index
    %c1_26 = arith.constant 1 : index
    %40 = vector.load %arg6[%c0_24, %c0_25, %c1_26] : memref<1x12x2xf32, #tpu.memory_space<vmem>>, vector<1x12x1xf32>
    %41 = vector.shape_cast %40 : vector<1x12x1xf32> to vector<12x1xf32>
    %42 = vector.shape_cast %39 : vector<12x1xf32> to vector<1x12x1xf32>
    tpu.vector_store %arg6[%c0_24, %c0_25, %c1_26], %42 {strides = array<i32>} : memref<1x12x2xf32, #tpu.memory_space<vmem>>, vector<1x12x1xf32>,
    %c0_27 = arith.constant 0 : index
    %c0_28 = arith.constant 0 : index
    %c0_29 = arith.constant 0 : index
    %43 = vector.load %arg5[%c0_27, %c0_28, %c0_29] : memref<1x12x324xf32, #tpu.memory_space<vmem>>, vector<1x12x324xf32>
    %44 = vector.shape_cast %43 : vector<1x12x324xf32> to vector<12x324xf32>
    %45 = vector.shape_cast %31 : vector<12x324xf32> to vector<1x12x324xf32>
    tpu.vector_store %arg5[%c0_27, %c0_28, %c0_29], %45 {strides = array<i32>} : memref<1x12x324xf32, #tpu.memory_space<vmem>>, vector<1x12x324xf32>,
    return
  }
  func.func @transform_0(%arg0: i32) -> (i32, i32, i32) {
    %c0_i32 = arith.constant 0 : i32
    %c0_i32_0 = arith.constant 0 : i32
    %c0_i32_1 = arith.constant 0 : i32
    return %arg0, %c0_i32, %c0_i32_0 : i32, i32, i32
  }
  func.func @transform_1(%arg0: i32) -> (i32, i32) {
    %c0_i32 = arith.constant 0 : i32
    %c0_i32_0 = arith.constant 0 : i32
    %c0_i32_1 = arith.constant 0 : i32
    return %c0_i32, %c0_i32_0 : i32, i32
  }
  func.func @transform_2(%arg0: i32) -> (i32, i32) {
    %c0_i32 = arith.constant 0 : i32
    %c0_i32_0 = arith.constant 0 : i32
    %c0_i32_1 = arith.constant 0 : i32
    return %c0_i32, %c0_i32_0 : i32, i32
  }
  func.func @transform_3(%arg0: i32) -> (i32, i32) {
    %c0_i32 = arith.constant 0 : i32
    %c0_i32_0 = arith.constant 0 : i32
    %c0_i32_1 = arith.constant 0 : i32
    return %c0_i32, %c0_i32_0 : i32, i32
  }
  func.func @transform_4(%arg0: i32) -> (i32, i32, i32) {
    %c0_i32 = arith.constant 0 : i32
    %c0_i32_0 = arith.constant 0 : i32
    %c0_i32_1 = arith.constant 0 : i32
    return %arg0, %c0_i32, %c0_i32_0 : i32, i32, i32
  }
  func.func @transform_5(%arg0: i32) -> (i32, i32, i32) {
    %c0_i32 = arith.constant 0 : i32
    %c0_i32_0 = arith.constant 0 : i32
    %c0_i32_1 = arith.constant 0 : i32
    return %arg0, %c0_i32, %c0_i32_0 : i32, i32, i32
  }
}

module attributes {stable_mosaic.version = 11 : i64} {
  func.func @_conv23_kernel(%arg0: i32, %arg1: memref<1x12x100xf32, #tpu.memory_space<vmem>>, %arg2: memref<20x108xf32, #tpu.memory_space<vmem>>, %arg3: memref<20x1xf32, #tpu.memory_space<vmem>>, %arg4: memref<32x180xf32, #tpu.memory_space<vmem>>, %arg5: memref<32x1xf32, #tpu.memory_space<vmem>>, %arg6: memref<1x100xf32, #tpu.memory_space<vmem>>, %arg7: memref<1x32x100xf32, #tpu.memory_space<vmem>>, %arg8: memref<1x32x2xf32, #tpu.memory_space<vmem>>, %arg9: memref<108x100xf32, #tpu.memory_space<vmem>>, %arg10: memref<180x100xf32, #tpu.memory_space<vmem>>) attributes {dimension_semantics = [#tpu.dimension_semantics<parallel>], iteration_bounds = array<i64: 2>, scalar_prefetch = 0 : i64, scratch_operands = 2 : i64, tpu.core_type = #tpu.core_type<tc>, window_params = [{transform_indices = @transform_0, window_bounds = array<i64: 1, 12, 100>}, {pipeline_mode = #tpu.pipeline_mode<synchronous>, transform_indices = @transform_1, window_bounds = array<i64: 20, 108>}, {pipeline_mode = #tpu.pipeline_mode<synchronous>, transform_indices = @transform_2, window_bounds = array<i64: 20, 1>}, {pipeline_mode = #tpu.pipeline_mode<synchronous>, transform_indices = @transform_3, window_bounds = array<i64: 32, 180>}, {pipeline_mode = #tpu.pipeline_mode<synchronous>, transform_indices = @transform_4, window_bounds = array<i64: 32, 1>}, {pipeline_mode = #tpu.pipeline_mode<synchronous>, transform_indices = @transform_5, window_bounds = array<i64: 1, 100>}, {transform_indices = @transform_6, window_bounds = array<i64: 1, 32, 100>}, {transform_indices = @transform_7, window_bounds = array<i64: 1, 32, 2>}]} {
    %c0 = arith.constant 0 : index
    %c0_0 = arith.constant 0 : index
    %0 = vector.load %arg6[%c0, %c0_0] : memref<1x100xf32, #tpu.memory_space<vmem>>, vector<1x100xf32>
    %cst = arith.constant 5.000000e-01 : f32
    %1 = vector.broadcast %cst : f32 to vector<1x100xf32>
    %2 = arith.cmpf ogt, %0, %1 : vector<1x100xf32>
    %c0_1 = arith.constant 0 : index
    %c0_2 = arith.constant 0 : index
    %c0_3 = arith.constant 0 : index
    %3 = vector.load %arg1[%c0_1, %c0_2, %c0_3] : memref<1x12x100xf32, #tpu.memory_space<vmem>>, vector<1x12x100xf32>
    %4 = vector.shape_cast %3 : vector<1x12x100xf32> to vector<12x100xf32>
    %c0_4 = arith.constant 0 : index
    %c0_5 = arith.constant 0 : index
    %5 = vector.load %arg2[%c0_4, %c0_5] : memref<20x108xf32, #tpu.memory_space<vmem>>, vector<20x108xf32>
    %c0_6 = arith.constant 0 : index
    %c0_7 = arith.constant 0 : index
    %6 = vector.load %arg3[%c0_6, %c0_7] : memref<20x1xf32, #tpu.memory_space<vmem>>, vector<20x1xf32>
    %7 = vector.extract_strided_slice %4 {offsets = [0, 0], sizes = [12, 89], strides = [1, 1]} : vector<12x100xf32> to vector<12x89xf32>
    %c0_8 = arith.constant 0 : index
    %c11 = arith.constant 11 : index
    %8 = vector.load %arg9[%c0_8, %c11] : memref<108x100xf32, #tpu.memory_space<vmem>>, vector<12x89xf32>
    tpu.vector_store %arg9[%c0_8, %c11], %7 {strides = array<i32>} : memref<108x100xf32, #tpu.memory_space<vmem>>, vector<12x89xf32>,
    %9 = vector.extract_strided_slice %4 {offsets = [0, 0], sizes = [12, 90], strides = [1, 1]} : vector<12x100xf32> to vector<12x90xf32>
    %c12 = arith.constant 12 : index
    %c10 = arith.constant 10 : index
    %10 = vector.load %arg9[%c12, %c10] : memref<108x100xf32, #tpu.memory_space<vmem>>, vector<12x90xf32>
    tpu.vector_store %arg9[%c12, %c10], %9 {strides = array<i32>} : memref<108x100xf32, #tpu.memory_space<vmem>>, vector<12x90xf32>,
    %11 = vector.extract_strided_slice %4 {offsets = [0, 0], sizes = [12, 91], strides = [1, 1]} : vector<12x100xf32> to vector<12x91xf32>
    %c24 = arith.constant 24 : index
    %c9 = arith.constant 9 : index
    %12 = vector.load %arg9[%c24, %c9] : memref<108x100xf32, #tpu.memory_space<vmem>>, vector<12x91xf32>
    tpu.vector_store %arg9[%c24, %c9], %11 {strides = array<i32>} : memref<108x100xf32, #tpu.memory_space<vmem>>, vector<12x91xf32>,
    %13 = vector.extract_strided_slice %4 {offsets = [0, 0], sizes = [12, 99], strides = [1, 1]} : vector<12x100xf32> to vector<12x99xf32>
    %c36 = arith.constant 36 : index
    %c1 = arith.constant 1 : index
    %14 = vector.load %arg9[%c36, %c1] : memref<108x100xf32, #tpu.memory_space<vmem>>, vector<12x99xf32>
    tpu.vector_store %arg9[%c36, %c1], %13 {strides = array<i32>} : memref<108x100xf32, #tpu.memory_space<vmem>>, vector<12x99xf32>,
    %c48 = arith.constant 48 : index
    %c0_9 = arith.constant 0 : index
    %15 = vector.load %arg9[%c48, %c0_9] : memref<108x100xf32, #tpu.memory_space<vmem>>, vector<12x100xf32>
    tpu.vector_store %arg9[%c48, %c0_9], %4 {strides = array<i32>} : memref<108x100xf32, #tpu.memory_space<vmem>>, vector<12x100xf32>,
    %16 = vector.extract_strided_slice %4 {offsets = [0, 1], sizes = [12, 99], strides = [1, 1]} : vector<12x100xf32> to vector<12x99xf32>
    %c60 = arith.constant 60 : index
    %c0_10 = arith.constant 0 : index
    %17 = vector.load %arg9[%c60, %c0_10] : memref<108x100xf32, #tpu.memory_space<vmem>>, vector<12x99xf32>
    tpu.vector_store %arg9[%c60, %c0_10], %16 {strides = array<i32>} : memref<108x100xf32, #tpu.memory_space<vmem>>, vector<12x99xf32>,
    %18 = vector.extract_strided_slice %4 {offsets = [0, 9], sizes = [12, 91], strides = [1, 1]} : vector<12x100xf32> to vector<12x91xf32>
    %c72 = arith.constant 72 : index
    %c0_11 = arith.constant 0 : index
    %19 = vector.load %arg9[%c72, %c0_11] : memref<108x100xf32, #tpu.memory_space<vmem>>, vector<12x91xf32>
    tpu.vector_store %arg9[%c72, %c0_11], %18 {strides = array<i32>} : memref<108x100xf32, #tpu.memory_space<vmem>>, vector<12x91xf32>,
    %20 = vector.extract_strided_slice %4 {offsets = [0, 10], sizes = [12, 90], strides = [1, 1]} : vector<12x100xf32> to vector<12x90xf32>
    %c84 = arith.constant 84 : index
    %c0_12 = arith.constant 0 : index
    %21 = vector.load %arg9[%c84, %c0_12] : memref<108x100xf32, #tpu.memory_space<vmem>>, vector<12x90xf32>
    tpu.vector_store %arg9[%c84, %c0_12], %20 {strides = array<i32>} : memref<108x100xf32, #tpu.memory_space<vmem>>, vector<12x90xf32>,
    %22 = vector.extract_strided_slice %4 {offsets = [0, 11], sizes = [12, 89], strides = [1, 1]} : vector<12x100xf32> to vector<12x89xf32>
    %c96 = arith.constant 96 : index
    %c0_13 = arith.constant 0 : index
    %23 = vector.load %arg9[%c96, %c0_13] : memref<108x100xf32, #tpu.memory_space<vmem>>, vector<12x89xf32>
    tpu.vector_store %arg9[%c96, %c0_13], %22 {strides = array<i32>} : memref<108x100xf32, #tpu.memory_space<vmem>>, vector<12x89xf32>,
    %c0_14 = arith.constant 0 : index
    %c0_15 = arith.constant 0 : index
    %24 = vector.load %arg9[%c0_14, %c0_15] : memref<108x100xf32, #tpu.memory_space<vmem>>, vector<108x100xf32>
    %cst_16 = arith.constant dense<0.000000e+00> : vector<20x100xf32>
    %25 = tpu.matmul %5, %24, %cst_16 {dimension_numbers = #tpu.dot_dimension_numbers<[1], [0], [0], [1], [0, 0, 1, 1], [], []>} : vector<20x108xf32>, vector<108x100xf32>, vector<20x100xf32> -> vector<20x100xf32>
    %26 = vector.broadcast %6 : vector<20x1xf32> to vector<20x100xf32>
    %27 = arith.addf %25, %26 : vector<20x100xf32>
    %cst_17 = arith.constant 0.000000e+00 : f32
    %28 = vector.shape_cast %2 : vector<1x100xi1> to vector<1x100xi1>
    %29 = vector.broadcast %28 : vector<1x100xi1> to vector<20x100xi1>
    %30 = vector.broadcast %cst_17 : f32 to vector<20x100xf32>
    %31 = arith.select %29, %27, %30 : vector<20x100xi1>, vector<20x100xf32>
    %cst_18 = arith.constant 0.000000e+00 : f32
    %32 = vector.broadcast %cst_18 : f32 to vector<20x100xf32>
    %33 = arith.maximumf %31, %32 : vector<20x100xf32>
    %c0_19 = arith.constant 0 : index
    %c0_20 = arith.constant 0 : index
    %34 = vector.load %arg4[%c0_19, %c0_20] : memref<32x180xf32, #tpu.memory_space<vmem>>, vector<32x180xf32>
    %c0_21 = arith.constant 0 : index
    %c0_22 = arith.constant 0 : index
    %35 = vector.load %arg5[%c0_21, %c0_22] : memref<32x1xf32, #tpu.memory_space<vmem>>, vector<32x1xf32>
    %36 = vector.extract_strided_slice %33 {offsets = [0, 0], sizes = [20, 89], strides = [1, 1]} : vector<20x100xf32> to vector<20x89xf32>
    %c0_23 = arith.constant 0 : index
    %c11_24 = arith.constant 11 : index
    %37 = vector.load %arg10[%c0_23, %c11_24] : memref<180x100xf32, #tpu.memory_space<vmem>>, vector<20x89xf32>
    tpu.vector_store %arg10[%c0_23, %c11_24], %36 {strides = array<i32>} : memref<180x100xf32, #tpu.memory_space<vmem>>, vector<20x89xf32>,
    %38 = vector.extract_strided_slice %33 {offsets = [0, 0], sizes = [20, 90], strides = [1, 1]} : vector<20x100xf32> to vector<20x90xf32>
    %c20 = arith.constant 20 : index
    %c10_25 = arith.constant 10 : index
    %39 = vector.load %arg10[%c20, %c10_25] : memref<180x100xf32, #tpu.memory_space<vmem>>, vector<20x90xf32>
    tpu.vector_store %arg10[%c20, %c10_25], %38 {strides = array<i32>} : memref<180x100xf32, #tpu.memory_space<vmem>>, vector<20x90xf32>,
    %40 = vector.extract_strided_slice %33 {offsets = [0, 0], sizes = [20, 91], strides = [1, 1]} : vector<20x100xf32> to vector<20x91xf32>
    %c40 = arith.constant 40 : index
    %c9_26 = arith.constant 9 : index
    %41 = vector.load %arg10[%c40, %c9_26] : memref<180x100xf32, #tpu.memory_space<vmem>>, vector<20x91xf32>
    tpu.vector_store %arg10[%c40, %c9_26], %40 {strides = array<i32>} : memref<180x100xf32, #tpu.memory_space<vmem>>, vector<20x91xf32>,
    %42 = vector.extract_strided_slice %33 {offsets = [0, 0], sizes = [20, 99], strides = [1, 1]} : vector<20x100xf32> to vector<20x99xf32>
    %c60_27 = arith.constant 60 : index
    %c1_28 = arith.constant 1 : index
    %43 = vector.load %arg10[%c60_27, %c1_28] : memref<180x100xf32, #tpu.memory_space<vmem>>, vector<20x99xf32>
    tpu.vector_store %arg10[%c60_27, %c1_28], %42 {strides = array<i32>} : memref<180x100xf32, #tpu.memory_space<vmem>>, vector<20x99xf32>,
    %c80 = arith.constant 80 : index
    %c0_29 = arith.constant 0 : index
    %44 = vector.load %arg10[%c80, %c0_29] : memref<180x100xf32, #tpu.memory_space<vmem>>, vector<20x100xf32>
    tpu.vector_store %arg10[%c80, %c0_29], %33 {strides = array<i32>} : memref<180x100xf32, #tpu.memory_space<vmem>>, vector<20x100xf32>,
    %45 = vector.extract_strided_slice %33 {offsets = [0, 1], sizes = [20, 99], strides = [1, 1]} : vector<20x100xf32> to vector<20x99xf32>
    %c100 = arith.constant 100 : index
    %c0_30 = arith.constant 0 : index
    %46 = vector.load %arg10[%c100, %c0_30] : memref<180x100xf32, #tpu.memory_space<vmem>>, vector<20x99xf32>
    tpu.vector_store %arg10[%c100, %c0_30], %45 {strides = array<i32>} : memref<180x100xf32, #tpu.memory_space<vmem>>, vector<20x99xf32>,
    %47 = vector.extract_strided_slice %33 {offsets = [0, 9], sizes = [20, 91], strides = [1, 1]} : vector<20x100xf32> to vector<20x91xf32>
    %c120 = arith.constant 120 : index
    %c0_31 = arith.constant 0 : index
    %48 = vector.load %arg10[%c120, %c0_31] : memref<180x100xf32, #tpu.memory_space<vmem>>, vector<20x91xf32>
    tpu.vector_store %arg10[%c120, %c0_31], %47 {strides = array<i32>} : memref<180x100xf32, #tpu.memory_space<vmem>>, vector<20x91xf32>,
    %49 = vector.extract_strided_slice %33 {offsets = [0, 10], sizes = [20, 90], strides = [1, 1]} : vector<20x100xf32> to vector<20x90xf32>
    %c140 = arith.constant 140 : index
    %c0_32 = arith.constant 0 : index
    %50 = vector.load %arg10[%c140, %c0_32] : memref<180x100xf32, #tpu.memory_space<vmem>>, vector<20x90xf32>
    tpu.vector_store %arg10[%c140, %c0_32], %49 {strides = array<i32>} : memref<180x100xf32, #tpu.memory_space<vmem>>, vector<20x90xf32>,
    %51 = vector.extract_strided_slice %33 {offsets = [0, 11], sizes = [20, 89], strides = [1, 1]} : vector<20x100xf32> to vector<20x89xf32>
    %c160 = arith.constant 160 : index
    %c0_33 = arith.constant 0 : index
    %52 = vector.load %arg10[%c160, %c0_33] : memref<180x100xf32, #tpu.memory_space<vmem>>, vector<20x89xf32>
    tpu.vector_store %arg10[%c160, %c0_33], %51 {strides = array<i32>} : memref<180x100xf32, #tpu.memory_space<vmem>>, vector<20x89xf32>,
    %c0_34 = arith.constant 0 : index
    %c0_35 = arith.constant 0 : index
    %53 = vector.load %arg10[%c0_34, %c0_35] : memref<180x100xf32, #tpu.memory_space<vmem>>, vector<180x100xf32>
    %cst_36 = arith.constant dense<0.000000e+00> : vector<32x100xf32>
    %54 = tpu.matmul %34, %53, %cst_36 {dimension_numbers = #tpu.dot_dimension_numbers<[1], [0], [0], [1], [0, 0, 1, 1], [], []>} : vector<32x180xf32>, vector<180x100xf32>, vector<32x100xf32> -> vector<32x100xf32>
    %55 = vector.broadcast %35 : vector<32x1xf32> to vector<32x100xf32>
    %56 = arith.addf %54, %55 : vector<32x100xf32>
    %cst_37 = arith.constant 0.000000e+00 : f32
    %57 = vector.shape_cast %2 : vector<1x100xi1> to vector<1x100xi1>
    %58 = vector.broadcast %57 : vector<1x100xi1> to vector<32x100xi1>
    %59 = vector.broadcast %cst_37 : f32 to vector<32x100xf32>
    %60 = arith.select %58, %56, %59 : vector<32x100xi1>, vector<32x100xf32>
    %cst_38 = arith.constant dense<0.000000e+00> : vector<32xf32>
    %61 = vector.multi_reduction <add>, %60, %cst_38 [1] : vector<32x100xf32> to vector<32xf32>
    %62 = vector.shape_cast %61 : vector<32xf32> to vector<32x1xf32>
    %c0_39 = arith.constant 0 : index
    %c0_40 = arith.constant 0 : index
    %c0_41 = arith.constant 0 : index
    %63 = vector.load %arg8[%c0_39, %c0_40, %c0_41] : memref<1x32x2xf32, #tpu.memory_space<vmem>>, vector<1x32x1xf32>
    %64 = vector.shape_cast %63 : vector<1x32x1xf32> to vector<32x1xf32>
    %65 = vector.shape_cast %62 : vector<32x1xf32> to vector<1x32x1xf32>
    tpu.vector_store %arg8[%c0_39, %c0_40, %c0_41], %65 {strides = array<i32>} : memref<1x32x2xf32, #tpu.memory_space<vmem>>, vector<1x32x1xf32>,
    %66 = arith.mulf %60, %60 : vector<32x100xf32>
    %cst_42 = arith.constant dense<0.000000e+00> : vector<32xf32>
    %67 = vector.multi_reduction <add>, %66, %cst_42 [1] : vector<32x100xf32> to vector<32xf32>
    %68 = vector.shape_cast %67 : vector<32xf32> to vector<32x1xf32>
    %c0_43 = arith.constant 0 : index
    %c0_44 = arith.constant 0 : index
    %c1_45 = arith.constant 1 : index
    %69 = vector.load %arg8[%c0_43, %c0_44, %c1_45] : memref<1x32x2xf32, #tpu.memory_space<vmem>>, vector<1x32x1xf32>
    %70 = vector.shape_cast %69 : vector<1x32x1xf32> to vector<32x1xf32>
    %71 = vector.shape_cast %68 : vector<32x1xf32> to vector<1x32x1xf32>
    tpu.vector_store %arg8[%c0_43, %c0_44, %c1_45], %71 {strides = array<i32>} : memref<1x32x2xf32, #tpu.memory_space<vmem>>, vector<1x32x1xf32>,
    %c0_46 = arith.constant 0 : index
    %c0_47 = arith.constant 0 : index
    %c0_48 = arith.constant 0 : index
    %72 = vector.load %arg7[%c0_46, %c0_47, %c0_48] : memref<1x32x100xf32, #tpu.memory_space<vmem>>, vector<1x32x100xf32>
    %73 = vector.shape_cast %72 : vector<1x32x100xf32> to vector<32x100xf32>
    %74 = vector.shape_cast %60 : vector<32x100xf32> to vector<1x32x100xf32>
    tpu.vector_store %arg7[%c0_46, %c0_47, %c0_48], %74 {strides = array<i32>} : memref<1x32x100xf32, #tpu.memory_space<vmem>>, vector<1x32x100xf32>,
    return
  }
  func.func @transform_0(%arg0: i32) -> (i32, i32, i32) {
    %c0_i32 = arith.constant 0 : i32
    %c0_i32_0 = arith.constant 0 : i32
    %c0_i32_1 = arith.constant 0 : i32
    return %arg0, %c0_i32, %c0_i32_0 : i32, i32, i32
  }
  func.func @transform_1(%arg0: i32) -> (i32, i32) {
    %c0_i32 = arith.constant 0 : i32
    %c0_i32_0 = arith.constant 0 : i32
    %c0_i32_1 = arith.constant 0 : i32
    return %c0_i32, %c0_i32_0 : i32, i32
  }
  func.func @transform_2(%arg0: i32) -> (i32, i32) {
    %c0_i32 = arith.constant 0 : i32
    %c0_i32_0 = arith.constant 0 : i32
    %c0_i32_1 = arith.constant 0 : i32
    return %c0_i32, %c0_i32_0 : i32, i32
  }
  func.func @transform_3(%arg0: i32) -> (i32, i32) {
    %c0_i32 = arith.constant 0 : i32
    %c0_i32_0 = arith.constant 0 : i32
    %c0_i32_1 = arith.constant 0 : i32
    return %c0_i32, %c0_i32_0 : i32, i32
  }
  func.func @transform_4(%arg0: i32) -> (i32, i32) {
    %c0_i32 = arith.constant 0 : i32
    %c0_i32_0 = arith.constant 0 : i32
    %c0_i32_1 = arith.constant 0 : i32
    return %c0_i32, %c0_i32_0 : i32, i32
  }
  func.func @transform_5(%arg0: i32) -> (i32, i32) {
    %c0_i32 = arith.constant 0 : i32
    %c0_i32_0 = arith.constant 0 : i32
    %c0_i32_1 = arith.constant 0 : i32
    return %c0_i32, %c0_i32_0 : i32, i32
  }
  func.func @transform_6(%arg0: i32) -> (i32, i32, i32) {
    %c0_i32 = arith.constant 0 : i32
    %c0_i32_0 = arith.constant 0 : i32
    %c0_i32_1 = arith.constant 0 : i32
    return %arg0, %c0_i32, %c0_i32_0 : i32, i32, i32
  }
  func.func @transform_7(%arg0: i32) -> (i32, i32, i32) {
    %c0_i32 = arith.constant 0 : i32
    %c0_i32_0 = arith.constant 0 : i32
    %c0_i32_1 = arith.constant 0 : i32
    return %arg0, %c0_i32, %c0_i32_0 : i32, i32, i32
  }
}

module attributes {stable_mosaic.version = 11 : i64} {
  func.func @_bn_relu_fc_kernel(%arg0: i32, %arg1: memref<1x32x100xf32, #tpu.memory_space<vmem>>, %arg2: memref<32x1xf32, #tpu.memory_space<vmem>>, %arg3: memref<32x1xf32, #tpu.memory_space<vmem>>, %arg4: memref<32x100xf32, #tpu.memory_space<vmem>>, %arg5: memref<1x32x1xf32, #tpu.memory_space<vmem>>) attributes {dimension_semantics = [#tpu.dimension_semantics<parallel>], iteration_bounds = array<i64: 2>, scalar_prefetch = 0 : i64, scratch_operands = 0 : i64, tpu.core_type = #tpu.core_type<tc>, window_params = [{transform_indices = @transform_0, window_bounds = array<i64: 1, 32, 100>}, {pipeline_mode = #tpu.pipeline_mode<synchronous>, transform_indices = @transform_1, window_bounds = array<i64: 32, 1>}, {pipeline_mode = #tpu.pipeline_mode<synchronous>, transform_indices = @transform_2, window_bounds = array<i64: 32, 1>}, {pipeline_mode = #tpu.pipeline_mode<synchronous>, transform_indices = @transform_3, window_bounds = array<i64: 32, 100>}, {transform_indices = @transform_4, window_bounds = array<i64: 1, 32, 1>}]} {
    %c0 = arith.constant 0 : index
    %c0_0 = arith.constant 0 : index
    %c0_1 = arith.constant 0 : index
    %0 = vector.load %arg1[%c0, %c0_0, %c0_1] : memref<1x32x100xf32, #tpu.memory_space<vmem>>, vector<1x32x100xf32>
    %1 = vector.shape_cast %0 : vector<1x32x100xf32> to vector<32x100xf32>
    %c0_2 = arith.constant 0 : index
    %c0_3 = arith.constant 0 : index
    %2 = vector.load %arg2[%c0_2, %c0_3] : memref<32x1xf32, #tpu.memory_space<vmem>>, vector<32x1xf32>
    %3 = vector.broadcast %2 : vector<32x1xf32> to vector<32x100xf32>
    %4 = arith.mulf %1, %3 : vector<32x100xf32>
    %c0_4 = arith.constant 0 : index
    %c0_5 = arith.constant 0 : index
    %5 = vector.load %arg3[%c0_4, %c0_5] : memref<32x1xf32, #tpu.memory_space<vmem>>, vector<32x1xf32>
    %6 = vector.broadcast %5 : vector<32x1xf32> to vector<32x100xf32>
    %7 = arith.addf %4, %6 : vector<32x100xf32>
    %cst = arith.constant 0.000000e+00 : f32
    %8 = vector.broadcast %cst : f32 to vector<32x100xf32>
    %9 = arith.maximumf %7, %8 : vector<32x100xf32>
    %c0_6 = arith.constant 0 : index
    %c0_7 = arith.constant 0 : index
    %10 = vector.load %arg4[%c0_6, %c0_7] : memref<32x100xf32, #tpu.memory_space<vmem>>, vector<32x100xf32>
    %11 = arith.mulf %9, %10 : vector<32x100xf32>
    %cst_8 = arith.constant dense<0.000000e+00> : vector<32xf32>
    %12 = vector.multi_reduction <add>, %11, %cst_8 [1] : vector<32x100xf32> to vector<32xf32>
    %13 = vector.shape_cast %12 : vector<32xf32> to vector<32x1xf32>
    %c0_9 = arith.constant 0 : index
    %c0_10 = arith.constant 0 : index
    %c0_11 = arith.constant 0 : index
    %14 = vector.load %arg5[%c0_9, %c0_10, %c0_11] : memref<1x32x1xf32, #tpu.memory_space<vmem>>, vector<1x32x1xf32>
    %15 = vector.shape_cast %14 : vector<1x32x1xf32> to vector<32x1xf32>
    %16 = vector.shape_cast %13 : vector<32x1xf32> to vector<1x32x1xf32>
    tpu.vector_store %arg5[%c0_9, %c0_10, %c0_11], %16 {strides = array<i32>} : memref<1x32x1xf32, #tpu.memory_space<vmem>>, vector<1x32x1xf32>,
    return
  }
  func.func @transform_0(%arg0: i32) -> (i32, i32, i32) {
    %c0_i32 = arith.constant 0 : i32
    %c0_i32_0 = arith.constant 0 : i32
    %c0_i32_1 = arith.constant 0 : i32
    return %arg0, %c0_i32, %c0_i32_0 : i32, i32, i32
  }
  func.func @transform_1(%arg0: i32) -> (i32, i32) {
    %c0_i32 = arith.constant 0 : i32
    %c0_i32_0 = arith.constant 0 : i32
    %c0_i32_1 = arith.constant 0 : i32
    return %c0_i32, %c0_i32_0 : i32, i32
  }
  func.func @transform_2(%arg0: i32) -> (i32, i32) {
    %c0_i32 = arith.constant 0 : i32
    %c0_i32_0 = arith.constant 0 : i32
    %c0_i32_1 = arith.constant 0 : i32
    return %c0_i32, %c0_i32_0 : i32, i32
  }
  func.func @transform_3(%arg0: i32) -> (i32, i32) {
    %c0_i32 = arith.constant 0 : i32
    %c0_i32_0 = arith.constant 0 : i32
    %c0_i32_1 = arith.constant 0 : i32
    return %c0_i32, %c0_i32_0 : i32, i32
  }
  func.func @transform_4(%arg0: i32) -> (i32, i32, i32) {
    %c0_i32 = arith.constant 0 : i32
    %c0_i32_0 = arith.constant 0 : i32
    %c0_i32_1 = arith.constant 0 : i32
    return %arg0, %c0_i32, %c0_i32_0 : i32, i32, i32
  }
}

</mosaic_0001>

<llo_original>
// kernel: dog_model_forward.3
$region0: #{dog_model_forward.3}
  #allocation0 [shape = 'u32[]', space=smem, size = 0x4, offset = 0x4, fixed_abs, tag = 'smem constant byte address 0x4 - core index']
  #allocation1 [shape = 'u32[144,128]{1,0:T(1,128)}', space=vmem, size = 0x12000, scoped, tag = 'internal scratch']
  #allocation2 [shape = 'f32[27,324]{1,0:T(8,128)}', space=vmem, size = 0xc000, scoped, tag = 'scratch operand']
  %s0 = inlined_call_operand.vmem [shape: f32[2,3,324], index: 0, kind: input, shape index: {}]
  %s1 = inlined_call_operand.vmem [shape: f32[12,27], index: 1, kind: input, shape index: {}]
  %s2 = inlined_call_operand.vmem [shape: f32[12,1], index: 2, kind: input, shape index: {}]
  %s3 = inlined_call_operand.vmem [shape: f32[1,324], index: 3, kind: input, shape index: {}]
  %s4 = inlined_call_operand.vmem [shape: f32[2,12,324], index: 4, kind: output, shape index: {0}]
  %s5 = inlined_call_operand.vmem [shape: f32[2,12,2], index: 5, kind: output, shape index: {1}]
  %6 = xla_tuple %s4, %s5
  %s7 = sld [smem:[#allocation0]]
  $region57: #{dog_model_forward.3} parent=0
    _
  %s9 = ssub.s32 1, %s7
  %s10 = scalar_select 0, %s9, %s7
  loop: start=0, step=1, limit=4
  $region2: #{dog_model_forward.3} parent=0 // loop_pre_header
    _
  $region3: #{dog_model_forward.3} parent=0 // loop_header
    %s12 = sphi 0, %s16
    %p13 = scmp.ge.s32.totalorder %s12, 4
    %s22 = sphi 0, %s24
    %s25 = sphi 0, %s22
    %s26 = sphi 0, %s25
    %s42 = sphi 0, %s26
    %s46 = sphi 0, %s46
    %s48 = sphi 0, %s46
    %s49 = sphi 0, %s48
    %s63 = sphi 0, %s49
    %s67 = sphi 0, %s67
    %s69 = sphi 0, %s67
    %s70 = sphi 0, %s69
    %s84 = sphi 0, %s70
    %s88 = sphi 0, %s88
    %s90 = sphi 0, %s88
    %s91 = sphi 0, %s90
    %s105 = sphi 0, %s91
    %s111 = sphi 0, %s113
    %s114 = sphi 0, %s111
    %s115 = sphi 0, %s114
    %s131 = sphi 0, %s115
    %s137 = sphi 0, %s139
    %s140 = sphi 0, %s137
    %s141 = sphi 0, %s140
    %s157 = sphi 0, %s141
  $region4: #{dog_model_forward.3} parent=0 // loop_header_branch
    %15 = sbr.rel (%p13) target = $region8
  $region5: #{dog_model_forward.3} parent=0 // loop_body
    %s17 = ssub.s32 %s12, 1
    %s18 = ssub.s32 %s12, 2
    %s19 = sadd.s32 %s12, 1
    %s20 = ssub.s32 %s12, %s19
    %p21 = scmp.eq.s32.totalorder %s20, 0
    %s23 = sadd.s32 %s22, 1
    %s24 = scalar_select %p21, %s22, %s23
    %p27 = pneg %p21
    %p28 = scmp.eq.s32.totalorder %s12, 1
    %p29 = por %p27, %p28
    %p30 = scmp.ne.s32.totalorder %s22, %s25
    %p31 = scmp.eq.s32.totalorder %s12, 0
    %p32 = por %p30, %p31
    %p33 = scmp.ne.s32.totalorder %s22, %s25
    %p34 = scmp.eq.s32.totalorder %s17, 1
    %p35 = por %p33, %p34
    %p36 = scmp.ne.s32.totalorder %s25, %s26
    %p37 = scmp.eq.s32.totalorder %s17, 0
    %p38 = por %p36, %p37
    %p39 = scmp.ne.s32.totalorder %s25, %s26
    %p40 = scmp.eq.s32.totalorder %s18, 1
    %p41 = por %p39, %p40
    %p43 = scmp.ne.s32.totalorder %s26, %s42
    %p44 = scmp.eq.s32.totalorder %s18, 0
    %p45 = por %p43, %p44
    %s47 = sadd.s32 %s46, 1
    %p50 = scmp.eq.s32.totalorder %s12, 1
    %p51 = scmp.ne.s32.totalorder %s46, %s48
    %p52 = scmp.eq.s32.totalorder %s12, 0
    %p53 = por %p51, %p52
    %p54 = scmp.ne.s32.totalorder %s46, %s48
    %p55 = scmp.eq.s32.totalorder %s17, 1
    %p56 = por %p54, %p55
    %p57 = scmp.ne.s32.totalorder %s48, %s49
    %p58 = scmp.eq.s32.totalorder %s17, 0
    %p59 = por %p57, %p58
    %p60 = scmp.ne.s32.totalorder %s48, %s49
    %p61 = scmp.eq.s32.totalorder %s18, 1
    %p62 = por %p60, %p61
    %p64 = scmp.ne.s32.totalorder %s49, %s63
    %p65 = scmp.eq.s32.totalorder %s18, 0
    %p66 = por %p64, %p65
    %s68 = sadd.s32 %s67, 1
    %p71 = scmp.eq.s32.totalorder %s12, 1
    %p72 = scmp.ne.s32.totalorder %s67, %s69
    %p73 = scmp.eq.s32.totalorder %s12, 0
    %p74 = por %p72, %p73
    %p75 = scmp.ne.s32.totalorder %s67, %s69
    %p76 = scmp.eq.s32.totalorder %s17, 1
    %p77 = por %p75, %p76
    %p78 = scmp.ne.s32.totalorder %s69, %s70
    %p79 = scmp.eq.s32.totalorder %s17, 0
    %p80 = por %p78, %p79
    %p81 = scmp.ne.s32.totalorder %s69, %s70
    %p82 = scmp.eq.s32.totalorder %s18, 1
    %p83 = por %p81, %p82
    %p85 = scmp.ne.s32.totalorder %s70, %s84
    %p86 = scmp.eq.s32.totalorder %s18, 0
    %p87 = por %p85, %p86
    %s89 = sadd.s32 %s88, 1
    %p92 = scmp.eq.s32.totalorder %s12, 1
    %p93 = scmp.ne.s32.totalorder %s88, %s90
    %p94 = scmp.eq.s32.totalorder %s12, 0
    %p95 = por %p93, %p94
    %p96 = scmp.ne.s32.totalorder %s88, %s90
    %p97 = scmp.eq.s32.totalorder %s17, 1
    %p98 = por %p96, %p97
    %p99 = scmp.ne.s32.totalorder %s90, %s91
    %p100 = scmp.eq.s32.totalorder %s17, 0
    %p101 = por %p99, %p100
    %p102 = scmp.ne.s32.totalorder %s90, %s91
    %p103 = scmp.eq.s32.totalorder %s18, 1
    %p104 = por %p102, %p103
    %p106 = scmp.ne.s32.totalorder %s91, %s105
    %p107 = scmp.eq.s32.totalorder %s18, 0
    %p108 = por %p106, %p107
    %s109 = ssub.s32 %s12, %s19
    %p110 = scmp.eq.s32.totalorder %s109, 0
    %s112 = sadd.s32 %s111, 1
    %s113 = scalar_select %p110, %s111, %s112
    %p116 = pneg %p110
    %p117 = scmp.eq.s32.totalorder %s12, 1
    %p118 = por %p116, %p117
    %p119 = scmp.ne.s32.totalorder %s111, %s114
    %p120 = scmp.eq.s32.totalorder %s12, 0
    %p121 = por %p119, %p120
    %p122 = scmp.ne.s32.totalorder %s111, %s114
    %p123 = scmp.eq.s32.totalorder %s17, 1
    %p124 = por %p122, %p123
    %p125 = scmp.ne.s32.totalorder %s114, %s115
    %p126 = scmp.eq.s32.totalorder %s17, 0
    %p127 = por %p125, %p126
    %p128 = scmp.ne.s32.totalorder %s114, %s115
    %p129 = scmp.eq.s32.totalorder %s18, 1
    %p130 = por %p128, %p129
    %p132 = scmp.ne.s32.totalorder %s115, %s131
    %p133 = scmp.eq.s32.totalorder %s18, 0
    %p134 = por %p132, %p133
    %s135 = ssub.s32 %s12, %s19
    %p136 = scmp.eq.s32.totalorder %s135, 0
    %s138 = sadd.s32 %s137, 1
    %s139 = scalar_select %p136, %s137, %s138
    %p142 = pneg %p136
    %p143 = scmp.eq.s32.totalorder %s12, 1
    %p144 = por %p142, %p143
    %p145 = scmp.ne.s32.totalorder %s137, %s140
    %p146 = scmp.eq.s32.totalorder %s12, 0
    %p147 = por %p145, %p146
    %p148 = scmp.ne.s32.totalorder %s137, %s140
    %p149 = scmp.eq.s32.totalorder %s17, 1
    %p150 = por %p148, %p149
    %p151 = scmp.ne.s32.totalorder %s140, %s141
    %p152 = scmp.eq.s32.totalorder %s17, 0
    %p153 = por %p151, %p152
    %p154 = scmp.ne.s32.totalorder %s140, %s141
    %p155 = scmp.eq.s32.totalorder %s18, 1
    %p156 = por %p154, %p155
    %p158 = scmp.ne.s32.totalorder %s141, %s157
    %p159 = scmp.eq.s32.totalorder %s18, 0
    %p160 = por %p158, %p159
    %p161 = scmp.le.s32.totalorder 1, %s12
    %p162 = scmp.lt.s32.totalorder %s12, 3
    %p163 = pnand %p161, %p162
    %p164 = pneg %p163
    // Predicated region
    $region9: #{dog_model_forward.3} parent=5 // pred_check
      _
    $region10: #{dog_model_forward.3} parent=5 // pred_check_branch
      %166 = sbr.rel (%p163) target = $region12
    $region11: #{dog_model_forward.3} parent=5 // pred_region
      %s167 = ssub.s32 %s12, 1
      // Predicated region
      $region13: #{dog_model_forward.3} parent=11 // pred_check
        %p168 = pneg %p59
      $region14: #{dog_model_forward.3} parent=11 // pred_check_branch
        %170 = sbr.rel (%p168) target = $region16
      $region15: #{dog_model_forward.3} parent=11 // pred_region
        _
      $region16: #{dog_model_forward.3} parent=11 // pred_fallthru
        _
      // Predicated region
      $region17: #{dog_model_forward.3} parent=11 // pred_check
        %p171 = pneg %p80
      $region18: #{dog_model_forward.3} parent=11 // pred_check_branch
        %173 = sbr.rel (%p171) target = $region20
      $region19: #{dog_model_forward.3} parent=11 // pred_region
        _
      $region20: #{dog_model_forward.3} parent=11 // pred_fallthru
        _
      // Predicated region
      $region21: #{dog_model_forward.3} parent=11 // pred_check
        %p174 = pneg %p101
      $region22: #{dog_model_forward.3} parent=11 // pred_check_branch
        %176 = sbr.rel (%p174) target = $region24
      $region23: #{dog_model_forward.3} parent=11 // pred_region
        _
      $region24: #{dog_model_forward.3} parent=11 // pred_fallthru
        _
    $region12: #{dog_model_forward.3} parent=5 // pred_fallthru
      _
    %p177 = scmp.lt.s32.totalorder %s12, 2
    // Predicated region
    $region25: #{dog_model_forward.3} parent=5 // pred_check
      %p178 = pneg %p177
    $region26: #{dog_model_forward.3} parent=5 // pred_check_branch
      %180 = sbr.rel (%p178) target = $region28
    $region27: #{dog_model_forward.3} parent=5 // pred_region
      // Predicated region
      $region29: #{dog_model_forward.3} parent=27 // pred_check
        %p181 = pneg %p32
      $region30: #{dog_model_forward.3} parent=27 // pred_check_branch
        %183 = sbr.rel (%p181) target = $region32
      $region31: #{dog_model_forward.3} parent=27 // pred_region
        %p184 = scmp.lt.s32.totalorder %s12, 1
        %s185 = scalar_select %p184, %s12, 1
        %s186 = smul.addr %s185, 3
        %s187 = smul.addr %s186, 4
        %s188 = scalar_lea.vmem %s0, %s187
      $region32: #{dog_model_forward.3} parent=27 // pred_fallthru
        _
    $region28: #{dog_model_forward.3} parent=5 // pred_fallthru
      _
    %p189 = scmp.le.s32.totalorder 1, %s12
    %p190 = scmp.lt.s32.totalorder %s12, 3
    %p191 = pnand %p189, %p190
    %p192 = pneg %p191
    // Predicated region
    $region33: #{dog_model_forward.3} parent=5 // pred_check
      _
    $region34: #{dog_model_forward.3} parent=5 // pred_check_branch
      %194 = sbr.rel (%p191) target = $region36
    $region35: #{dog_model_forward.3} parent=5 // pred_region
      %s195 = ssub.s32 %s12, 1
      %p196 = scmp.lt.s32.totalorder %s17, 1
      %s197 = scalar_select %p196, %s17, 1
      %s198 = smul.addr %s197, 3
      %s199 = smul.addr %s198, 4
      %s200 = scalar_lea.vmem %s0, %s199
      %p201 = pneg %p38
      %p202 = pneg %p35
      %p203 = pneg %p59
      %p204 = pneg %p56
      %p205 = pneg %p80
      %p206 = pneg %p77
      %p207 = pneg %p101
      %p208 = pneg %p98
      %p209 = pneg %p127
      %p210 = pneg %p124
      %p211 = scmp.lt.s32.totalorder %s17, 1
      %s212 = scalar_select %p211, %s17, 1
      %s213 = smul.addr %s212, 6
      %s214 = smul.addr %s213, 8
      %s215 = scalar_lea.vmem %s4, %s214
      %p216 = pneg %p153
      %p217 = pneg %p150
      %p218 = scmp.lt.s32.totalorder %s17, 1
      %s219 = scalar_select %p218, %s17, 1
      %s220 = smul.addr %s219, 2
      %s221 = smul.addr %s220, 8
      %s222 = scalar_lea.vmem %s5, %s221
      %p223 = scmp.lt.s32.totalorder %s17, 1
      %s224 = scalar_select %p223, %s17, 1
      %s225 = smul.addr %s224, 3
      %s226 = smul.addr %s225, 4
      %s227 = scalar_lea.vmem %s0, %s226
      %p228 = scmp.lt.s32.totalorder %s17, 1
      %s229 = scalar_select %p228, %s17, 1
      %s230 = smul.addr %s229, 6
      %s231 = smul.addr %s230, 8
      %s232 = scalar_lea.vmem %s4, %s231
      %p233 = scmp.lt.s32.totalorder %s17, 1
      %s234 = scalar_select %p233, %s17, 1
      %s235 = smul.addr %s234, 2
      %s236 = smul.addr %s235, 8
      %s237 = scalar_lea.vmem %s5, %s236
      %v238 = vld [vmem:[%s3] sm:$0x7]
      %vm239 = vcmp.gt.f32.partialorder %v238, 0.5
      %v240 = vld [vmem:[%s227] sm:$0x77]
      %v241 = vld [vmem:[%s227 + $0x8] sm:$0x7]
      %v242 = vld [vmem:[%s1] sm:$0xff]
      %v243 = vld [vmem:[%s1 + $0x8] sm:$0xf]
      %v244 = vld [vmem:[%s2] sm:$0xff]
      %v245 = vld [vmem:[%s2 + $0x8] sm:$0xf]
      %v248 = vcombine.high %v240, %v240
      %249 = vrot.lane.b32.xlu0 %v240, 19
      %v250 = vpop.permute.xlu0 %249
      %251 = vrot.lane.b32.xlu0 %v248, 19
      %v252 = vpop.permute.xlu0 %251
      %253 = vrot.lane.b32.xlu0 %v241, 19
      %v254 = vpop.permute.xlu0 %253
      %vm255 = vcmask 154624
      %v256 = vsel %vm255, %v250, %v252
      %v257 = vsel %vm255, %v252, %v254
      %vm261 = vcmask 1042584
      %262 = vst.msk [vmem:[#allocation2] sm:$0x7] %vm261, %v250
      %263 = vst [vmem:[#allocation2 + $0x8] sm:$0x7] %v256
      %vm264 = vcmask 550912
      %265 = vst.msk [vmem:[#allocation2 + $0x10] sm:$0x7] %vm264, %v257
      %v266 = vrot.slane %v240, 5
      %v267 = vrot.slane %v248, 5
      %v268 = vrot.slane %v241, 5
      %269 = vrot.lane.b32.xlu0 %v266, 18
      %v270 = vpop.permute.xlu0 %269
      %271 = vrot.lane.b32.xlu0 %v267, 18
      %v272 = vpop.permute.xlu0 %271
      %273 = vrot.lane.b32.xlu0 %v268, 18
      %v274 = vpop.permute.xlu0 %273
      %vm275 = vcmask 146432
      %v276 = vsel %vm275, %v270, %v272
      %v277 = vsel %vm275, %v272, %v274
      %vm281 = vcmask 1045651
      %282 = vst.msk [vmem:[#allocation2] sm:$0x38] %vm281, %v270
      %283 = vst [vmem:[#allocation2 + $0x8] sm:$0x38] %v276
      %vm284 = vcmask 553987
      %285 = vst.msk [vmem:[#allocation2 + $0x10] sm:$0x38] %vm284, %v277
      %v286 = vrot.slane %v240, 2
      %v287 = vrot.slane %v248, 2
      %v288 = vrot.slane %v241, 2
      %289 = vrot.lane.b32.xlu0 %v286, 17
      %v290 = vpop.permute.xlu0 %289
      %291 = vrot.lane.b32.xlu0 %v287, 17
      %v292 = vpop.permute.xlu0 %291
      %293 = vrot.lane.b32.xlu0 %v288, 17
      %v294 = vpop.permute.xlu0 %293
      %vm295 = vcmask 138240
      %v296 = vsel %vm295, %v290, %v292
      %v297 = vsel %vm295, %v292, %v294
      %vm301 = vcmask 1047694
      %302 = vst.msk [vmem:[#allocation2] sm:$0xc0] %vm301, %v290
      %303 = vst [vmem:[#allocation2 + $0x8] sm:$0xc0] %v296
      %vm304 = vcmask 556038
      %305 = vst.msk [vmem:[#allocation2 + $0x10] sm:$0xc0] %vm304, %v297
      %vm306 = vcmask 1040520
      %307 = vst.msk [vmem:[#allocation2 + $0x18] sm:$0x1] %vm306, %v290
      %308 = vst [vmem:[#allocation2 + $0x20] sm:$0x1] %v296
      %vm309 = vcmask 548864
      %310 = vst.msk [vmem:[#allocation2 + $0x28] sm:$0x1] %vm309, %v297
      %v311 = vrot.slane %v240, 7
      %v312 = vrot.slane %v248, 7
      %v313 = vrot.slane %v241, 7
      %314 = vrot.lane.b32.xlu0 %v311, 1
      %v315 = vpop.permute.xlu0 %314
      %316 = vrot.lane.b32.xlu0 %v312, 1
      %v317 = vpop.permute.xlu0 %316
      %318 = vrot.lane.b32.xlu0 %v313, 1
      %v319 = vpop.permute.xlu0 %318
      %vm320 = vcmask 7168
      %v321 = vsel %vm320, %v315, %v317
      %v322 = vsel %vm320, %v317, %v319
      %vm326 = vcmask 1043465
      %327 = vst.msk [vmem:[#allocation2 + $0x18] sm:$0xe] %vm326, %v315
      %328 = vst [vmem:[#allocation2 + $0x20] sm:$0xe] %v321
      %vm329 = vcmask 551937
      %330 = vst.msk [vmem:[#allocation2 + $0x28] sm:$0xe] %vm329, %v322
      %v331 = vcombine.low %v240, %v240
      %v332 = vcombine.low %v241, %v241
      %335 = vst [vmem:[#allocation2 + $0x18] sm:$0x70] %v331
      %336 = vst [vmem:[#allocation2 + $0x20] sm:$0x70] %v240
      %vm337 = vcmask 555012
      %338 = vst.msk [vmem:[#allocation2 + $0x28] sm:$0x70] %vm337, %v332
      %v339 = vrot.slane %v240, 1
      %v340 = vrot.slane %v248, 1
      %v341 = vrot.slane %v241, 1
      %342 = vrot.lane.b32.xlu0 %v339, 127
      %v343 = vpop.permute.xlu0 %342
      %344 = vrot.lane.b32.xlu0 %v340, 127
      %v345 = vpop.permute.xlu0 %344
      %346 = vrot.lane.b32.xlu0 %v341, 127
      %v347 = vpop.permute.xlu0 %346
      %vm348 = vcmask 1039360
      %v349 = vsel %vm348, %v343, %v345
      %v350 = vsel %vm348, %v345, %v347
      %354 = vst [vmem:[#allocation2 + $0x18] sm:$0x80] %v349
      %355 = vst [vmem:[#allocation2 + $0x20] sm:$0x80] %v350
      %vm356 = vcmask 547847
      %357 = vst.msk [vmem:[#allocation2 + $0x28] sm:$0x80] %vm356, %v347
      %358 = vst [vmem:[#allocation2 + $0x30] sm:$0x3] %v349
      %359 = vst [vmem:[#allocation2 + $0x38] sm:$0x3] %v350
      %vm360 = vcmask 541696
      %361 = vst.msk [vmem:[#allocation2 + $0x40] sm:$0x3] %vm360, %v347
      %v362 = vrot.slane %v240, 6
      %v363 = vrot.slane %v248, 6
      %v364 = vrot.slane %v241, 6
      %365 = vrot.lane.b32.xlu0 %v362, 111
      %v366 = vpop.permute.xlu0 %365
      %367 = vrot.lane.b32.xlu0 %v363, 111
      %v368 = vpop.permute.xlu0 %367
      %369 = vrot.lane.b32.xlu0 %v364, 111
      %v370 = vpop.permute.xlu0 %369
      %vm371 = vcmask 908288
      %v372 = vsel %vm371, %v366, %v368
      %v373 = vsel %vm371, %v368, %v370
      %377 = vst [vmem:[#allocation2 + $0x30] sm:$0x1c] %v372
      %378 = vst [vmem:[#allocation2 + $0x38] sm:$0x1c] %v373
      %vm379 = vcmask 413698
      %380 = vst.msk [vmem:[#allocation2 + $0x40] sm:$0x1c] %vm379, %v370
      %v381 = vrot.slane %v240, 3
      %v382 = vrot.slane %v248, 3
      %v383 = vrot.slane %v241, 3
      %384 = vrot.lane.b32.xlu0 %v381, 110
      %v385 = vpop.permute.xlu0 %384
      %386 = vrot.lane.b32.xlu0 %v382, 110
      %v387 = vpop.permute.xlu0 %386
      %388 = vrot.lane.b32.xlu0 %v383, 110
      %v389 = vpop.permute.xlu0 %388
      %vm390 = vcmask 900096
      %v391 = vsel %vm390, %v385, %v387
      %v392 = vsel %vm390, %v387, %v389
      %396 = vst [vmem:[#allocation2 + $0x30] sm:$0xe0] %v391
      %397 = vst [vmem:[#allocation2 + $0x38] sm:$0xe0] %v392
      %vm398 = vcmask 408581
      %399 = vst.msk [vmem:[#allocation2 + $0x40] sm:$0xe0] %vm398, %v389
      %400 = vrot.lane.b32.xlu0 %v240, 109
      %v401 = vpop.permute.xlu0 %400
      %402 = vrot.lane.b32.xlu0 %v248, 109
      %v403 = vpop.permute.xlu0 %402
      %404 = vrot.lane.b32.xlu0 %v241, 109
      %v405 = vpop.permute.xlu0 %404
      %vm406 = vcmask 891904
      %v407 = vsel %vm406, %v401, %v403
      %v408 = vsel %vm406, %v403, %v405
      %412 = vst [vmem:[#allocation2 + $0x48] sm:$0x7] %v407
      %413 = vst [vmem:[#allocation2 + $0x50] sm:$0x7] %v408
      %vm414 = vcmask 395264
      %415 = vst.msk [vmem:[#allocation2 + $0x58] sm:$0x7] %vm414, %v405
      %v416 = vld [vmem:[#allocation2] sm:$0xff]
      %v417 = vld [vmem:[#allocation2 + $0x8] sm:$0xff]
      %v418 = vld [vmem:[#allocation2 + $0x10] sm:$0xff]
      %v419 = vld [vmem:[#allocation2 + $0x18] sm:$0xff]
      %v420 = vld [vmem:[#allocation2 + $0x20] sm:$0xff]
      %v421 = vld [vmem:[#allocation2 + $0x28] sm:$0xff]
      %v422 = vld [vmem:[#allocation2 + $0x30] sm:$0xff]
      %v423 = vld [vmem:[#allocation2 + $0x38] sm:$0xff]
      %v424 = vld [vmem:[#allocation2 + $0x40] sm:$0xff]
      %v425 = vld [vmem:[#allocation2 + $0x48] sm:$0x7]
      %v426 = vld [vmem:[#allocation2 + $0x50] sm:$0x7]
      %v427 = vld [vmem:[#allocation2 + $0x58] sm:$0x7]
      %429 = vset.pattern.permute.xlu0 0
      %430 = vperm.xlu0 %429, %v244
      %v431 = vpop.permute.xlu0 %430
      %434 = vset.pattern.permute.xlu0 0
      %435 = vperm.xlu0 %434, %v245
      %v436 = vpop.permute.xlu0 %435
      %vm438 = vcmask 220160
      %v440 = vsel %vm438, %v242, 0
      %v443 = vsel %vm438, %v243, 0
      %vm445 = vcmask 1042432
      %v447 = vsel %vm445, %v425, 0
      %v450 = vsel %vm445, %v426, 0
      %v453 = vsel %vm445, %v427, 0
      %455 = vmatprep.subr.mxu0 %v417
      %456 = vmatpush1.msra.mxu0 %v416
      %457 = vmatprep.subr.mxu0 %v420
      %458 = vmatpush1.msra.mxu0 %v419
      %459 = vmatprep.subr.mxu0 %v423
      %460 = vmatpush1.msra.mxu0 %v422
      %461 = vmatprep.subr.mxu0 %v450
      %462 = vmatpush1.msra.mxu0 %v447
      %463 = vmatprep.subr.mxu0 0.0
      %464 = vmatpush1.msra.mxu0 0.0
      %465 = vmatprep.subr.mxu0 0.0
      %466 = vmatpush1.msra.mxu0 0.0
      %467 = vmatprep.subr.mxu0 0.0
      %468 = vmatpush1.msra.mxu0 0.0
      %469 = vmatprep.subr.mxu0 0.0
      %470 = vmatpush1.msra.mxu0 0.0
      %471 = vmatprep.subr.mxu0 0.0
      %472 = vmatpush1.msra.mxu0 0.0
      %473 = vmatprep.subr.mxu0 0.0
      %474 = vmatpush1.msra.mxu0 0.0
      %475 = vmatprep.subr.mxu0 0.0
      %476 = vmatpush1.msra.mxu0 0.0
      %477 = vmatprep.subr.mxu0 0.0
      %478 = vmatpush1.msra.mxu0 0.0
      %479 = vmatprep.subr.mxu0 0.0
      %480 = vmatpush1.msra.mxu0 0.0
      %481 = vmatprep.subr.mxu0 0.0
      %482 = vmatpush1.msra.mxu0 0.0
      %483 = vmatprep.subr.mxu0 0.0
      %484 = vmatpush1.msra.mxu0 0.0
      %485 = vmatprep.subr.mxu0 0.0
      %486 = vmatpush1.msra.mxu0 0.0
      %487 = vmatprep.subr.mxu0 0.0
      %488 = vmatpush1.msra.mxu0 0.0
      %489 = vmatprep.subr.mxu0 0.0
      %490 = vmatpush1.msra.mxu0 0.0
      %491 = vmatprep.subr.mxu0 0.0
      %492 = vmatpush1.msra.mxu0 0.0
      %493 = vmatprep.subr.mxu0 0.0
      %494 = vmatpush1.msra.mxu0 0.0
      %495 = vmatprep.subr.mxu0 0.0
      %496 = vmatpush1.msra.mxu0 0.0
      %497 = vmatprep.subr.mxu0 0.0
      %498 = vmatpush1.msra.mxu0 0.0
      %499 = vmatprep.subr.mxu0 0.0
      %500 = vmatpush1.msra.mxu0 0.0
      %501 = vmatprep.subr.mxu0 0.0
      %502 = vmatpush1.msra.mxu0 0.0
      %503 = vmatprep.subr.mxu0 0.0
      %504 = vmatpush1.msra.mxu0 0.0
      %505 = vmatprep.subr.mxu0 0.0
      %506 = vmatpush1.msra.mxu0 0.0
      %507 = vmatprep.subr.mxu0 0.0
      %508 = vmatpush1.msra.mxu0 0.0
      %509 = vmatprep.subr.mxu0 0.0
      %510 = vmatpush1.msra.mxu0 0.0
      %511 = vmatprep.subr.mxu0 0.0
      %512 = vmatpush1.msra.mxu0 0.0
      %513 = vmatprep.subr.mxu0 0.0
      %514 = vmatpush1.msra.mxu0 0.0
      %515 = vmatprep.subr.mxu0 0.0
      %516 = vmatpush1.msra.mxu0 0.0
      %517 = vmatprep.subr.mxu0 0.0
      %518 = vmatpush1.msra.mxu0 0.0
      %519 = vmatprep.mubr.f32.mxu0 0.0
      %520 = vmatmul.mubr.f32.gmra.mrb[0].mxu0 %v440
      %v521 = vpop.f32.mrb[0].mxu0
      %v522 = vadd.f32 %v431, %v521
      %v523 = vpop.f32.mrb[0].mxu0
      %v524 = vadd.f32 %v431, %v523
      %525 = vmatprep.mubr.f32.mxu0 0.0
      %526 = vmatmul.mubr.f32.gmra.mrb[0].mxu0 %v443
      %v527 = vpop.f32.mrb[0].mxu0
      %v528 = vadd.f32 %v436, %v527
      %v529 = vpop.f32.mrb[0].mxu0
      %v530 = vadd.f32 %v436, %v529
      %531 = vdwg.mxu0
      %532 = vmatprep.subr.mxu0 0.0
      %533 = vmatpush1.msra.mxu0 %v418
      %534 = vmatprep.subr.mxu0 0.0
      %535 = vmatpush1.msra.mxu0 %v421
      %536 = vmatprep.subr.mxu0 0.0
      %537 = vmatpush1.msra.mxu0 %v424
      %538 = vmatprep.subr.mxu0 0.0
      %539 = vmatpush1.msra.mxu0 %v453
      %540 = vmatprep.subr.mxu0 0.0
      %541 = vmatpush1.msra.mxu0 0.0
      %542 = vmatprep.subr.mxu0 0.0
      %543 = vmatpush1.msra.mxu0 0.0
      %544 = vmatprep.subr.mxu0 0.0
      %545 = vmatpush1.msra.mxu0 0.0
      %546 = vmatprep.subr.mxu0 0.0
      %547 = vmatpush1.msra.mxu0 0.0
      %548 = vmatprep.subr.mxu0 0.0
      %549 = vmatpush1.msra.mxu0 0.0
      %550 = vmatprep.subr.mxu0 0.0
      %551 = vmatpush1.msra.mxu0 0.0
      %552 = vmatprep.subr.mxu0 0.0
      %553 = vmatpush1.msra.mxu0 0.0
      %554 = vmatprep.subr.mxu0 0.0
      %555 = vmatpush1.msra.mxu0 0.0
      %556 = vmatprep.subr.mxu0 0.0
      %557 = vmatpush1.msra.mxu0 0.0
      %558 = vmatprep.subr.mxu0 0.0
      %559 = vmatpush1.msra.mxu0 0.0
      %560 = vmatprep.subr.mxu0 0.0
      %561 = vmatpush1.msra.mxu0 0.0
      %562 = vmatprep.subr.mxu0 0.0
      %563 = vmatpush1.msra.mxu0 0.0
      %564 = vmatprep.subr.mxu0 0.0
      %565 = vmatpush1.msra.mxu0 0.0
      %566 = vmatprep.subr.mxu0 0.0
      %567 = vmatpush1.msra.mxu0 0.0
      %568 = vmatprep.subr.mxu0 0.0
      %569 = vmatpush1.msra.mxu0 0.0
      %570 = vmatprep.subr.mxu0 0.0
      %571 = vmatpush1.msra.mxu0 0.0
      %572 = vmatprep.subr.mxu0 0.0
      %573 = vmatpush1.msra.mxu0 0.0
      %574 = vmatprep.subr.mxu0 0.0
      %575 = vmatpush1.msra.mxu0 0.0
      %576 = vmatprep.subr.mxu0 0.0
      %577 = vmatpush1.msra.mxu0 0.0
      %578 = vmatprep.subr.mxu0 0.0
      %579 = vmatpush1.msra.mxu0 0.0
      %580 = vmatprep.subr.mxu0 0.0
      %581 = vmatpush1.msra.mxu0 0.0
      %582 = vmatprep.subr.mxu0 0.0
      %583 = vmatpush1.msra.mxu0 0.0
      %584 = vmatprep.subr.mxu0 0.0
      %585 = vmatpush1.msra.mxu0 0.0
      %586 = vmatprep.subr.mxu0 0.0
      %587 = vmatpush1.msra.mxu0 0.0
      %588 = vmatprep.subr.mxu0 0.0
      %589 = vmatpush1.msra.mxu0 0.0
      %590 = vmatprep.subr.mxu0 0.0
      %591 = vmatpush1.msra.mxu0 0.0
      %592 = vmatprep.subr.mxu0 0.0
      %593 = vmatpush1.msra.mxu0 0.0
      %594 = vmatprep.subr.mxu0 0.0
      %595 = vmatpush1.msra.mxu0 0.0
      %596 = vmatprep.mubr.f32.mxu0 0.0
      %597 = vmatmul.mubr.f32.gmra.mrb[0].mxu0 %v440
      %v598 = vpop.f32.mrb[0].mxu0
      %v599 = vadd.f32 %v431, %v598
      %v600 = vpop.f32.mrb[0].mxu0
      %601 = vmatprep.mubr.f32.mxu0 0.0
      %602 = vmatmul.mubr.f32.gmra.mrb[0].mxu0 %v443
      %v603 = vpop.f32.mrb[0].mxu0
      %v604 = vadd.f32 %v436, %v603
      %v605 = vpop.f32.mrb[0].mxu0
      %606 = vdwg.mxu0
      %v607 = vsel %vm239, 1, 0
      %v608 = vlaneseq
      %v609 = vshrl.u32 %v608, 7
      %v610 = vsub.s32 0, %v609
      %v611 = vrot.slane %v607, %v610
      %v612 = vlaneseq
      %v613 = vshrl.u32 %v612, 7
      %v614 = vsub.s32 1, %v613
      %v615 = vrot.slane %v607, %v614
      %v616 = vlaneseq
      %v617 = vshrl.u32 %v616, 7
      %v618 = vsub.s32 2, %v617
      %v619 = vrot.slane %v607, %v618
      %vm620 = vcmp.eq.s32.totalorder %v611, 1
      %vm621 = vcmp.eq.s32.totalorder %v615, 1
      %vm622 = vcmp.eq.s32.totalorder %v619, 1
      %v623 = vsel %vm620, %v522, 0.0
      %v624 = vsel %vm621, %v524, 0.0
      %v625 = vsel %vm622, %v599, 0.0
      %v626 = vsel %vm620, %v528, 0.0
      %v627 = vsel %vm621, %v530, 0.0
      %v628 = vsel %vm622, %v604, 0.0
      %v629 = vadd.f32 %v623, %v624
      %vm630 = vcmask 556032
      %v631 = vsel %vm630, %v625, 0.0
      %v632 = vadd.f32 %v629, %v631
      %633 = vadd.xlane.f32.xlu0 %v632
      %v634 = vpop.xlane.xlu0 %633
      %vm635 = vcmask 1043456
      %v636 = vsel %vm635, %v626, 0.0
      %v637 = vsel %vm635, %v627, 0.0
      %v638 = vadd.f32 %v636, %v637
      %vm639 = vcmask 551936
      %v640 = vsel %vm639, %v628, 0.0
      %v641 = vadd.f32 %v638, %v640
      %642 = vadd.xlane.f32.xlu0 %v641
      %v643 = vpop.xlane.xlu0 %642
      %644 = vst.msk [vmem:[%s237] sm:$0xff] %vm320, %v634
      %vm645 = vcmask 3072
      %646 = vst.msk [vmem:[%s237 + $0x8] sm:$0xf] %vm645, %v643
      %v647 = vmul.f32 %v623, %v623
      %v648 = vmul.f32 %v624, %v624
      %v649 = vmul.f32 %v625, %v625
      %v650 = vmul.f32 %v626, %v626
      %v651 = vmul.f32 %v627, %v627
      %v652 = vmul.f32 %v628, %v628
      %v653 = vadd.f32 %v647, %v648
      %v654 = vsel %vm630, %v649, 0.0
      %v655 = vadd.f32 %v653, %v654
      %656 = vadd.xlane.f32.xlu0 %v655
      %v657 = vpop.xlane.xlu0 %656
      %v658 = vsel %vm635, %v650, 0.0
      %v659 = vsel %vm635, %v651, 0.0
      %v660 = vadd.f32 %v658, %v659
      %v661 = vsel %vm639, %v652, 0.0
      %v662 = vadd.f32 %v660, %v661
      %663 = vadd.xlane.f32.xlu0 %v662
      %v664 = vpop.xlane.xlu0 %663
      %vm665 = vcmask 15368
      %666 = vst.msk [vmem:[%s237] sm:$0xff] %vm665, %v657
      %vm667 = vcmask 11272
      %668 = vst.msk [vmem:[%s237 + $0x8] sm:$0xf] %vm667, %v664
      %669 = vst [vmem:[%s232] sm:$0xff] %v623
      %670 = vst [vmem:[%s232 + $0x8] sm:$0xff] %v624
      %671 = vst.msk [vmem:[%s232 + $0x10] sm:$0xff] %vm630, %v625
      %672 = vst [vmem:[%s232 + $0x18] sm:$0xf] %v626
      %673 = vst [vmem:[%s232 + $0x20] sm:$0xf] %v627
      %674 = vst.msk [vmem:[%s232 + $0x28] sm:$0xf] %vm639, %v628
      %p675 = scmp.lt.s32.totalorder %s17, 1
      %s676 = scalar_select %p675, %s17, 1
      %s677 = smul.addr %s676, 6
      %s678 = smul.addr %s677, 8
      %s679 = scalar_lea.vmem %s4, %s678
      %p680 = scmp.lt.s32.totalorder %s17, 1
      %s681 = scalar_select %p680, %s17, 1
      %s682 = smul.addr %s681, 2
      %s683 = smul.addr %s682, 8
      %s684 = scalar_lea.vmem %s5, %s683
      // Predicated region
      $region37: #{dog_model_forward.3} parent=35 // pred_check
        %p685 = pneg %p124
      $region38: #{dog_model_forward.3} parent=35 // pred_check_branch
        %687 = sbr.rel (%p685) target = $region40
      $region39: #{dog_model_forward.3} parent=35 // pred_region
        _
      $region40: #{dog_model_forward.3} parent=35 // pred_fallthru
        _
      // Predicated region
      $region41: #{dog_model_forward.3} parent=35 // pred_check
        %p688 = pneg %p150
      $region42: #{dog_model_forward.3} parent=35 // pred_check_branch
        %690 = sbr.rel (%p688) target = $region44
      $region43: #{dog_model_forward.3} parent=35 // pred_region
        _
      $region44: #{dog_model_forward.3} parent=35 // pred_fallthru
        _
    $region36: #{dog_model_forward.3} parent=5 // pred_fallthru
      _
    %p691 = scmp.le.s32.totalorder 2, %s12
    // Predicated region
    $region45: #{dog_model_forward.3} parent=5 // pred_check
      %p692 = pneg %p691
    $region46: #{dog_model_forward.3} parent=5 // pred_check_branch
      %694 = sbr.rel (%p692) target = $region48
    $region47: #{dog_model_forward.3} parent=5 // pred_region
      %s695 = ssub.s32 %s12, 2
      // Predicated region
      $region49: #{dog_model_forward.3} parent=47 // pred_check
        %p696 = pneg %p130
      $region50: #{dog_model_forward.3} parent=47 // pred_check_branch
        %698 = sbr.rel (%p696) target = $region52
      $region51: #{dog_model_forward.3} parent=47 // pred_region
        %p699 = scmp.lt.s32.totalorder %s18, 1
        %s700 = scalar_select %p699, %s18, 1
        %s701 = smul.addr %s700, 6
        %s702 = smul.addr %s701, 8
        %s703 = scalar_lea.vmem %s4, %s702
      $region52: #{dog_model_forward.3} parent=47 // pred_fallthru
        _
      // Predicated region
      $region53: #{dog_model_forward.3} parent=47 // pred_check
        %p704 = pneg %p156
      $region54: #{dog_model_forward.3} parent=47 // pred_check_branch
        %706 = sbr.rel (%p704) target = $region56
      $region55: #{dog_model_forward.3} parent=47 // pred_region
        %p707 = scmp.lt.s32.totalorder %s18, 1
        %s708 = scalar_select %p707, %s18, 1
        %s709 = smul.addr %s708, 2
        %s710 = smul.addr %s709, 8
        %s711 = scalar_lea.vmem %s5, %s710
      $region56: #{dog_model_forward.3} parent=47 // pred_fallthru
        _
    $region48: #{dog_model_forward.3} parent=5 // pred_fallthru
      _
  $region6: #{dog_model_forward.3} parent=0 // loop_footer
    %s16 = sadd.s32 1, %s12
  $region7: #{dog_model_forward.3} parent=0 // loop_footer_branch
    %11 = sbr.rel target = $region3
  $region8: #{dog_model_forward.3} parent=0 // loop_exit
    _

// kernel: dog_model_forward.5
$region0: #{dog_model_forward.5}
  #allocation0 [shape = 'u32[]', space=smem, size = 0x4, offset = 0x4, fixed_abs, tag = 'smem constant byte address 0x4 - core index']
  #allocation1 [shape = 'u32[144,128]{1,0:T(1,128)}', space=vmem, size = 0x12000, scoped, tag = 'internal scratch']
  %s0 = inlined_call_operand.vmem [shape: f32[2,32,100], index: 0, kind: input, shape index: {}]
  %s1 = inlined_call_operand.vmem [shape: f32[32,1], index: 1, kind: input, shape index: {}]
  %s2 = inlined_call_operand.vmem [shape: f32[32,1], index: 2, kind: input, shape index: {}]
  %s3 = inlined_call_operand.vmem [shape: f32[32,100], index: 3, kind: input, shape index: {}]
  %s4 = inlined_call_operand.vmem [shape: f32[2,32,1], index: 4, kind: output, shape index: {}]
  %s5 = sld [smem:[#allocation0]]
  $region49: #{dog_model_forward.5} parent=0
    _
  %s7 = ssub.s32 1, %s5
  %s8 = scalar_select 0, %s7, %s5
  loop: start=0, step=1, limit=4
  $region2: #{dog_model_forward.5} parent=0 // loop_pre_header
    _
  $region3: #{dog_model_forward.5} parent=0 // loop_header
    %s10 = sphi 0, %s14
    %p11 = scmp.ge.s32.totalorder %s10, 4
    %s20 = sphi 0, %s22
    %s23 = sphi 0, %s20
    %s24 = sphi 0, %s23
    %s40 = sphi 0, %s24
    %s44 = sphi 0, %s44
    %s46 = sphi 0, %s44
    %s47 = sphi 0, %s46
    %s61 = sphi 0, %s47
    %s65 = sphi 0, %s65
    %s67 = sphi 0, %s65
    %s68 = sphi 0, %s67
    %s82 = sphi 0, %s68
    %s86 = sphi 0, %s86
    %s88 = sphi 0, %s86
    %s89 = sphi 0, %s88
    %s103 = sphi 0, %s89
    %s109 = sphi 0, %s111
    %s112 = sphi 0, %s109
    %s113 = sphi 0, %s112
    %s129 = sphi 0, %s113
  $region4: #{dog_model_forward.5} parent=0 // loop_header_branch
    %13 = sbr.rel (%p11) target = $region8
  $region5: #{dog_model_forward.5} parent=0 // loop_body
    %s15 = ssub.s32 %s10, 1
    %s16 = ssub.s32 %s10, 2
    %s17 = sadd.s32 %s10, 1
    %s18 = ssub.s32 %s10, %s17
    %p19 = scmp.eq.s32.totalorder %s18, 0
    %s21 = sadd.s32 %s20, 1
    %s22 = scalar_select %p19, %s20, %s21
    %p25 = pneg %p19
    %p26 = scmp.eq.s32.totalorder %s10, 1
    %p27 = por %p25, %p26
    %p28 = scmp.ne.s32.totalorder %s20, %s23
    %p29 = scmp.eq.s32.totalorder %s10, 0
    %p30 = por %p28, %p29
    %p31 = scmp.ne.s32.totalorder %s20, %s23
    %p32 = scmp.eq.s32.totalorder %s15, 1
    %p33 = por %p31, %p32
    %p34 = scmp.ne.s32.totalorder %s23, %s24
    %p35 = scmp.eq.s32.totalorder %s15, 0
    %p36 = por %p34, %p35
    %p37 = scmp.ne.s32.totalorder %s23, %s24
    %p38 = scmp.eq.s32.totalorder %s16, 1
    %p39 = por %p37, %p38
    %p41 = scmp.ne.s32.totalorder %s24, %s40
    %p42 = scmp.eq.s32.totalorder %s16, 0
    %p43 = por %p41, %p42
    %s45 = sadd.s32 %s44, 1
    %p48 = scmp.eq.s32.totalorder %s10, 1
    %p49 = scmp.ne.s32.totalorder %s44, %s46
    %p50 = scmp.eq.s32.totalorder %s10, 0
    %p51 = por %p49, %p50
    %p52 = scmp.ne.s32.totalorder %s44, %s46
    %p53 = scmp.eq.s32.totalorder %s15, 1
    %p54 = por %p52, %p53
    %p55 = scmp.ne.s32.totalorder %s46, %s47
    %p56 = scmp.eq.s32.totalorder %s15, 0
    %p57 = por %p55, %p56
    %p58 = scmp.ne.s32.totalorder %s46, %s47
    %p59 = scmp.eq.s32.totalorder %s16, 1
    %p60 = por %p58, %p59
    %p62 = scmp.ne.s32.totalorder %s47, %s61
    %p63 = scmp.eq.s32.totalorder %s16, 0
    %p64 = por %p62, %p63
    %s66 = sadd.s32 %s65, 1
    %p69 = scmp.eq.s32.totalorder %s10, 1
    %p70 = scmp.ne.s32.totalorder %s65, %s67
    %p71 = scmp.eq.s32.totalorder %s10, 0
    %p72 = por %p70, %p71
    %p73 = scmp.ne.s32.totalorder %s65, %s67
    %p74 = scmp.eq.s32.totalorder %s15, 1
    %p75 = por %p73, %p74
    %p76 = scmp.ne.s32.totalorder %s67, %s68
    %p77 = scmp.eq.s32.totalorder %s15, 0
    %p78 = por %p76, %p77
    %p79 = scmp.ne.s32.totalorder %s67, %s68
    %p80 = scmp.eq.s32.totalorder %s16, 1
    %p81 = por %p79, %p80
    %p83 = scmp.ne.s32.totalorder %s68, %s82
    %p84 = scmp.eq.s32.totalorder %s16, 0
    %p85 = por %p83, %p84
    %s87 = sadd.s32 %s86, 1
    %p90 = scmp.eq.s32.totalorder %s10, 1
    %p91 = scmp.ne.s32.totalorder %s86, %s88
    %p92 = scmp.eq.s32.totalorder %s10, 0
    %p93 = por %p91, %p92
    %p94 = scmp.ne.s32.totalorder %s86, %s88
    %p95 = scmp.eq.s32.totalorder %s15, 1
    %p96 = por %p94, %p95
    %p97 = scmp.ne.s32.totalorder %s88, %s89
    %p98 = scmp.eq.s32.totalorder %s15, 0
    %p99 = por %p97, %p98
    %p100 = scmp.ne.s32.totalorder %s88, %s89
    %p101 = scmp.eq.s32.totalorder %s16, 1
    %p102 = por %p100, %p101
    %p104 = scmp.ne.s32.totalorder %s89, %s103
    %p105 = scmp.eq.s32.totalorder %s16, 0
    %p106 = por %p104, %p105
    %s107 = ssub.s32 %s10, %s17
    %p108 = scmp.eq.s32.totalorder %s107, 0
    %s110 = sadd.s32 %s109, 1
    %s111 = scalar_select %p108, %s109, %s110
    %p114 = pneg %p108
    %p115 = scmp.eq.s32.totalorder %s10, 1
    %p116 = por %p114, %p115
    %p117 = scmp.ne.s32.totalorder %s109, %s112
    %p118 = scmp.eq.s32.totalorder %s10, 0
    %p119 = por %p117, %p118
    %p120 = scmp.ne.s32.totalorder %s109, %s112
    %p121 = scmp.eq.s32.totalorder %s15, 1
    %p122 = por %p120, %p121
    %p123 = scmp.ne.s32.totalorder %s112, %s113
    %p124 = scmp.eq.s32.totalorder %s15, 0
    %p125 = por %p123, %p124
    %p126 = scmp.ne.s32.totalorder %s112, %s113
    %p127 = scmp.eq.s32.totalorder %s16, 1
    %p128 = por %p126, %p127
    %p130 = scmp.ne.s32.totalorder %s113, %s129
    %p131 = scmp.eq.s32.totalorder %s16, 0
    %p132 = por %p130, %p131
    %p133 = scmp.le.s32.totalorder 1, %s10
    %p134 = scmp.lt.s32.totalorder %s10, 3
    %p135 = pnand %p133, %p134
    %p136 = pneg %p135
    // Predicated region
    $region9: #{dog_model_forward.5} parent=5 // pred_check
      _
    $region10: #{dog_model_forward.5} parent=5 // pred_check_branch
      %138 = sbr.rel (%p135) target = $region12
    $region11: #{dog_model_forward.5} parent=5 // pred_region
      %s139 = ssub.s32 %s10, 1
      // Predicated region
      $region13: #{dog_model_forward.5} parent=11 // pred_check
        %p140 = pneg %p57
      $region14: #{dog_model_forward.5} parent=11 // pred_check_branch
        %142 = sbr.rel (%p140) target = $region16
      $region15: #{dog_model_forward.5} parent=11 // pred_region
        _
      $region16: #{dog_model_forward.5} parent=11 // pred_fallthru
        _
      // Predicated region
      $region17: #{dog_model_forward.5} parent=11 // pred_check
        %p143 = pneg %p78
      $region18: #{dog_model_forward.5} parent=11 // pred_check_branch
        %145 = sbr.rel (%p143) target = $region20
      $region19: #{dog_model_forward.5} parent=11 // pred_region
        _
      $region20: #{dog_model_forward.5} parent=11 // pred_fallthru
        _
      // Predicated region
      $region21: #{dog_model_forward.5} parent=11 // pred_check
        %p146 = pneg %p99
      $region22: #{dog_model_forward.5} parent=11 // pred_check_branch
        %148 = sbr.rel (%p146) target = $region24
      $region23: #{dog_model_forward.5} parent=11 // pred_region
        _
      $region24: #{dog_model_forward.5} parent=11 // pred_fallthru
        _
    $region12: #{dog_model_forward.5} parent=5 // pred_fallthru
      _
    %p149 = scmp.lt.s32.totalorder %s10, 2
    // Predicated region
    $region25: #{dog_model_forward.5} parent=5 // pred_check
      %p150 = pneg %p149
    $region26: #{dog_model_forward.5} parent=5 // pred_check_branch
      %152 = sbr.rel (%p150) target = $region28
    $region27: #{dog_model_forward.5} parent=5 // pred_region
      // Predicated region
      $region29: #{dog_model_forward.5} parent=27 // pred_check
        %p153 = pneg %p30
      $region30: #{dog_model_forward.5} parent=27 // pred_check_branch
        %155 = sbr.rel (%p153) target = $region32
      $region31: #{dog_model_forward.5} parent=27 // pred_region
        %p156 = scmp.lt.s32.totalorder %s10, 1
        %s157 = scalar_select %p156, %s10, 1
        %s158 = smul.addr %s157, 4
        %s159 = smul.addr %s158, 8
        %s160 = scalar_lea.vmem %s0, %s159
      $region32: #{dog_model_forward.5} parent=27 // pred_fallthru
        _
    $region28: #{dog_model_forward.5} parent=5 // pred_fallthru
      _
    %p161 = scmp.le.s32.totalorder 1, %s10
    %p162 = scmp.lt.s32.totalorder %s10, 3
    %p163 = pnand %p161, %p162
    %p164 = pneg %p163
    // Predicated region
    $region33: #{dog_model_forward.5} parent=5 // pred_check
      _
    $region34: #{dog_model_forward.5} parent=5 // pred_check_branch
      %166 = sbr.rel (%p163) target = $region36
    $region35: #{dog_model_forward.5} parent=5 // pred_region
      %s167 = ssub.s32 %s10, 1
      %p168 = scmp.lt.s32.totalorder %s15, 1
      %s169 = scalar_select %p168, %s15, 1
      %s170 = smul.addr %s169, 4
      %s171 = smul.addr %s170, 8
      %s172 = scalar_lea.vmem %s0, %s171
      %p173 = pneg %p36
      %p174 = pneg %p33
      %p175 = pneg %p57
      %p176 = pneg %p54
      %p177 = pneg %p78
      %p178 = pneg %p75
      %p179 = pneg %p99
      %p180 = pneg %p96
      %p181 = pneg %p125
      %p182 = pneg %p122
      %p183 = scmp.lt.s32.totalorder %s15, 1
      %s184 = scalar_select %p183, %s15, 1
      %s185 = smul.addr %s184, 4
      %s186 = smul.addr %s185, 8
      %s187 = scalar_lea.vmem %s4, %s186
      %p188 = scmp.lt.s32.totalorder %s15, 1
      %s189 = scalar_select %p188, %s15, 1
      %s190 = smul.addr %s189, 4
      %s191 = smul.addr %s190, 8
      %s192 = scalar_lea.vmem %s0, %s191
      %p193 = scmp.lt.s32.totalorder %s15, 1
      %s194 = scalar_select %p193, %s15, 1
      %s195 = smul.addr %s194, 4
      %s196 = smul.addr %s195, 8
      %s197 = scalar_lea.vmem %s4, %s196
      %v198 = vld [vmem:[%s192] sm:$0xff]
      %v199 = vld [vmem:[%s192 + $0x8] sm:$0xff]
      %v200 = vld [vmem:[%s192 + $0x10] sm:$0xff]
      %v201 = vld [vmem:[%s192 + $0x18] sm:$0xff]
      %v202 = vld [vmem:[%s1] sm:$0xff]
      %v203 = vld [vmem:[%s1 + $0x8] sm:$0xff]
      %v204 = vld [vmem:[%s1 + $0x10] sm:$0xff]
      %v205 = vld [vmem:[%s1 + $0x18] sm:$0xff]
      %207 = vset.pattern.permute.xlu0 0
      %208 = vperm.xlu0 %207, %v202
      %v209 = vpop.permute.xlu0 %208
      %212 = vset.pattern.permute.xlu0 0
      %213 = vperm.xlu0 %212, %v203
      %v214 = vpop.permute.xlu0 %213
      %217 = vset.pattern.permute.xlu0 0
      %218 = vperm.xlu0 %217, %v204
      %v219 = vpop.permute.xlu0 %218
      %222 = vset.pattern.permute.xlu0 0
      %223 = vperm.xlu0 %222, %v205
      %v224 = vpop.permute.xlu0 %223
      %v226 = vmul.f32 %v198, %v209
      %v227 = vmul.f32 %v199, %v214
      %v228 = vmul.f32 %v200, %v219
      %v229 = vmul.f32 %v201, %v224
      %v230 = vld [vmem:[%s2] sm:$0xff]
      %v231 = vld [vmem:[%s2 + $0x8] sm:$0xff]
      %v232 = vld [vmem:[%s2 + $0x10] sm:$0xff]
      %v233 = vld [vmem:[%s2 + $0x18] sm:$0xff]
      %235 = vset.pattern.permute.xlu0 0
      %236 = vperm.xlu0 %235, %v230
      %v237 = vpop.permute.xlu0 %236
      %240 = vset.pattern.permute.xlu0 0
      %241 = vperm.xlu0 %240, %v231
      %v242 = vpop.permute.xlu0 %241
      %245 = vset.pattern.permute.xlu0 0
      %246 = vperm.xlu0 %245, %v232
      %v247 = vpop.permute.xlu0 %246
      %250 = vset.pattern.permute.xlu0 0
      %251 = vperm.xlu0 %250, %v233
      %v252 = vpop.permute.xlu0 %251
      %v254 = vadd.f32 %v226, %v237
      %v255 = vadd.f32 %v227, %v242
      %v256 = vadd.f32 %v228, %v247
      %v257 = vadd.f32 %v229, %v252
      %v258 = vmax.f32 %v254, 0.0
      %v259 = vmax.f32 %v255, 0.0
      %v260 = vmax.f32 %v256, 0.0
      %v261 = vmax.f32 %v257, 0.0
      %v262 = vld [vmem:[%s3] sm:$0xff]
      %v263 = vld [vmem:[%s3 + $0x8] sm:$0xff]
      %v264 = vld [vmem:[%s3 + $0x10] sm:$0xff]
      %v265 = vld [vmem:[%s3 + $0x18] sm:$0xff]
      %v266 = vmul.f32 %v258, %v262
      %v267 = vmul.f32 %v259, %v263
      %v268 = vmul.f32 %v260, %v264
      %v269 = vmul.f32 %v261, %v265
      %vm270 = vcmask 818176
      %v271 = vsel %vm270, %v266, 0.0
      %272 = vadd.xlane.f32.xlu0 %v271
      %v273 = vpop.xlane.xlu0 %272
      %v274 = vsel %vm270, %v267, 0.0
      %275 = vadd.xlane.f32.xlu0 %v274
      %v276 = vpop.xlane.xlu0 %275
      %v277 = vsel %vm270, %v268, 0.0
      %278 = vadd.xlane.f32.xlu0 %v277
      %v279 = vpop.xlane.xlu0 %278
      %v280 = vsel %vm270, %v269, 0.0
      %281 = vadd.xlane.f32.xlu0 %v280
      %v282 = vpop.xlane.xlu0 %281
      %vm283 = vcmask 7168
      %284 = vst.msk [vmem:[%s197] sm:$0xff] %vm283, %v273
      %285 = vst.msk [vmem:[%s197 + $0x8] sm:$0xff] %vm283, %v276
      %286 = vst.msk [vmem:[%s197 + $0x10] sm:$0xff] %vm283, %v279
      %287 = vst.msk [vmem:[%s197 + $0x18] sm:$0xff] %vm283, %v282
      %p288 = scmp.lt.s32.totalorder %s15, 1
      %s289 = scalar_select %p288, %s15, 1
      %s290 = smul.addr %s289, 4
      %s291 = smul.addr %s290, 8
      %s292 = scalar_lea.vmem %s4, %s291
      // Predicated region
      $region37: #{dog_model_forward.5} parent=35 // pred_check
        %p293 = pneg %p122
      $region38: #{dog_model_forward.5} parent=35 // pred_check_branch
        %295 = sbr.rel (%p293) target = $region40
      $region39: #{dog_model_forward.5} parent=35 // pred_region
        _
      $region40: #{dog_model_forward.5} parent=35 // pred_fallthru
        _
    $region36: #{dog_model_forward.5} parent=5 // pred_fallthru
      _
    %p296 = scmp.le.s32.totalorder 2, %s10
    // Predicated region
    $region41: #{dog_model_forward.5} parent=5 // pred_check
      %p297 = pneg %p296
    $region42: #{dog_model_forward.5} parent=5 // pred_check_branch
      %299 = sbr.rel (%p297) target = $region44
    $region43: #{dog_model_forward.5} parent=5 // pred_region
      %s300 = ssub.s32 %s10, 2
      // Predicated region
      $region45: #{dog_model_forward.5} parent=43 // pred_check
        %p301 = pneg %p128
      $region46: #{dog_model_forward.5} parent=43 // pred_check_branch
        %303 = sbr.rel (%p301) target = $region48
      $region47: #{dog_model_forward.5} parent=43 // pred_region
        %p304 = scmp.lt.s32.totalorder %s16, 1
        %s305 = scalar_select %p304, %s16, 1
        %s306 = smul.addr %s305, 4
        %s307 = smul.addr %s306, 8
        %s308 = scalar_lea.vmem %s4, %s307
      $region48: #{dog_model_forward.5} parent=43 // pred_fallthru
        _
    $region44: #{dog_model_forward.5} parent=5 // pred_fallthru
      _
  $region6: #{dog_model_forward.5} parent=0 // loop_footer
    %s14 = sadd.s32 1, %s10
  $region7: #{dog_model_forward.5} parent=0 // loop_footer_branch
    %9 = sbr.rel target = $region3
  $region8: #{dog_model_forward.5} parent=0 // loop_exit
    _

// kernel: dog_model_forward.4
$region0: #{dog_model_forward.4}
  #allocation0 [shape = 'u32[]', space=smem, size = 0x4, offset = 0x4, fixed_abs, tag = 'smem constant byte address 0x4 - core index']
  #allocation1 [shape = 'u32[144,128]{1,0:T(1,128)}', space=vmem, size = 0x12000, scoped, tag = 'internal scratch']
  #allocation2 [shape = 'f32[108,100]{1,0:T(8,128)}', space=vmem, size = 0xe000, scoped, tag = 'scratch operand']
  #allocation3 [shape = 'f32[180,100]{1,0:T(8,128)}', space=vmem, size = 0x17000, scoped, tag = 'scratch operand']
  %s0 = inlined_call_operand.vmem [shape: f32[2,12,100], index: 0, kind: input, shape index: {}]
  %s1 = inlined_call_operand.vmem [shape: f32[20,108], index: 1, kind: input, shape index: {}]
  %s2 = inlined_call_operand.vmem [shape: f32[20,1], index: 2, kind: input, shape index: {}]
  %s3 = inlined_call_operand.vmem [shape: f32[32,180], index: 3, kind: input, shape index: {}]
  %s4 = inlined_call_operand.vmem [shape: f32[32,1], index: 4, kind: input, shape index: {}]
  %s5 = inlined_call_operand.vmem [shape: f32[1,100], index: 5, kind: input, shape index: {}]
  %s6 = inlined_call_operand.vmem [shape: f32[2,32,100], index: 6, kind: output, shape index: {0}]
  %s7 = inlined_call_operand.vmem [shape: f32[2,32,2], index: 7, kind: output, shape index: {1}]
  %8 = xla_tuple %s6, %s7
  %s9 = sld [smem:[#allocation0]]
  $region65: #{dog_model_forward.4} parent=0
    _
  %s11 = ssub.s32 1, %s9
  %s12 = scalar_select 0, %s11, %s9
  loop: start=0, step=1, limit=4
  $region2: #{dog_model_forward.4} parent=0 // loop_pre_header
    _
  $region3: #{dog_model_forward.4} parent=0 // loop_header
    %s14 = sphi 0, %s18
    %p15 = scmp.ge.s32.totalorder %s14, 4
    %s24 = sphi 0, %s26
    %s27 = sphi 0, %s24
    %s28 = sphi 0, %s27
    %s44 = sphi 0, %s28
    %s48 = sphi 0, %s48
    %s50 = sphi 0, %s48
    %s51 = sphi 0, %s50
    %s65 = sphi 0, %s51
    %s69 = sphi 0, %s69
    %s71 = sphi 0, %s69
    %s72 = sphi 0, %s71
    %s86 = sphi 0, %s72
    %s90 = sphi 0, %s90
    %s92 = sphi 0, %s90
    %s93 = sphi 0, %s92
    %s107 = sphi 0, %s93
    %s111 = sphi 0, %s111
    %s113 = sphi 0, %s111
    %s114 = sphi 0, %s113
    %s128 = sphi 0, %s114
    %s132 = sphi 0, %s132
    %s134 = sphi 0, %s132
    %s135 = sphi 0, %s134
    %s149 = sphi 0, %s135
    %s155 = sphi 0, %s157
    %s158 = sphi 0, %s155
    %s159 = sphi 0, %s158
    %s175 = sphi 0, %s159
    %s181 = sphi 0, %s183
    %s184 = sphi 0, %s181
    %s185 = sphi 0, %s184
    %s201 = sphi 0, %s185
  $region4: #{dog_model_forward.4} parent=0 // loop_header_branch
    %17 = sbr.rel (%p15) target = $region8
  $region5: #{dog_model_forward.4} parent=0 // loop_body
    %s19 = ssub.s32 %s14, 1
    %s20 = ssub.s32 %s14, 2
    %s21 = sadd.s32 %s14, 1
    %s22 = ssub.s32 %s14, %s21
    %p23 = scmp.eq.s32.totalorder %s22, 0
    %s25 = sadd.s32 %s24, 1
    %s26 = scalar_select %p23, %s24, %s25
    %p29 = pneg %p23
    %p30 = scmp.eq.s32.totalorder %s14, 1
    %p31 = por %p29, %p30
    %p32 = scmp.ne.s32.totalorder %s24, %s27
    %p33 = scmp.eq.s32.totalorder %s14, 0
    %p34 = por %p32, %p33
    %p35 = scmp.ne.s32.totalorder %s24, %s27
    %p36 = scmp.eq.s32.totalorder %s19, 1
    %p37 = por %p35, %p36
    %p38 = scmp.ne.s32.totalorder %s27, %s28
    %p39 = scmp.eq.s32.totalorder %s19, 0
    %p40 = por %p38, %p39
    %p41 = scmp.ne.s32.totalorder %s27, %s28
    %p42 = scmp.eq.s32.totalorder %s20, 1
    %p43 = por %p41, %p42
    %p45 = scmp.ne.s32.totalorder %s28, %s44
    %p46 = scmp.eq.s32.totalorder %s20, 0
    %p47 = por %p45, %p46
    %s49 = sadd.s32 %s48, 1
    %p52 = scmp.eq.s32.totalorder %s14, 1
    %p53 = scmp.ne.s32.totalorder %s48, %s50
    %p54 = scmp.eq.s32.totalorder %s14, 0
    %p55 = por %p53, %p54
    %p56 = scmp.ne.s32.totalorder %s48, %s50
    %p57 = scmp.eq.s32.totalorder %s19, 1
    %p58 = por %p56, %p57
    %p59 = scmp.ne.s32.totalorder %s50, %s51
    %p60 = scmp.eq.s32.totalorder %s19, 0
    %p61 = por %p59, %p60
    %p62 = scmp.ne.s32.totalorder %s50, %s51
    %p63 = scmp.eq.s32.totalorder %s20, 1
    %p64 = por %p62, %p63
    %p66 = scmp.ne.s32.totalorder %s51, %s65
    %p67 = scmp.eq.s32.totalorder %s20, 0
    %p68 = por %p66, %p67
    %s70 = sadd.s32 %s69, 1
    %p73 = scmp.eq.s32.totalorder %s14, 1
    %p74 = scmp.ne.s32.totalorder %s69, %s71
    %p75 = scmp.eq.s32.totalorder %s14, 0
    %p76 = por %p74, %p75
    %p77 = scmp.ne.s32.totalorder %s69, %s71
    %p78 = scmp.eq.s32.totalorder %s19, 1
    %p79 = por %p77, %p78
    %p80 = scmp.ne.s32.totalorder %s71, %s72
    %p81 = scmp.eq.s32.totalorder %s19, 0
    %p82 = por %p80, %p81
    %p83 = scmp.ne.s32.totalorder %s71, %s72
    %p84 = scmp.eq.s32.totalorder %s20, 1
    %p85 = por %p83, %p84
    %p87 = scmp.ne.s32.totalorder %s72, %s86
    %p88 = scmp.eq.s32.totalorder %s20, 0
    %p89 = por %p87, %p88
    %s91 = sadd.s32 %s90, 1
    %p94 = scmp.eq.s32.totalorder %s14, 1
    %p95 = scmp.ne.s32.totalorder %s90, %s92
    %p96 = scmp.eq.s32.totalorder %s14, 0
    %p97 = por %p95, %p96
    %p98 = scmp.ne.s32.totalorder %s90, %s92
    %p99 = scmp.eq.s32.totalorder %s19, 1
    %p100 = por %p98, %p99
    %p101 = scmp.ne.s32.totalorder %s92, %s93
    %p102 = scmp.eq.s32.totalorder %s19, 0
    %p103 = por %p101, %p102
    %p104 = scmp.ne.s32.totalorder %s92, %s93
    %p105 = scmp.eq.s32.totalorder %s20, 1
    %p106 = por %p104, %p105
    %p108 = scmp.ne.s32.totalorder %s93, %s107
    %p109 = scmp.eq.s32.totalorder %s20, 0
    %p110 = por %p108, %p109
    %s112 = sadd.s32 %s111, 1
    %p115 = scmp.eq.s32.totalorder %s14, 1
    %p116 = scmp.ne.s32.totalorder %s111, %s113
    %p117 = scmp.eq.s32.totalorder %s14, 0
    %p118 = por %p116, %p117
    %p119 = scmp.ne.s32.totalorder %s111, %s113
    %p120 = scmp.eq.s32.totalorder %s19, 1
    %p121 = por %p119, %p120
    %p122 = scmp.ne.s32.totalorder %s113, %s114
    %p123 = scmp.eq.s32.totalorder %s19, 0
    %p124 = por %p122, %p123
    %p125 = scmp.ne.s32.totalorder %s113, %s114
    %p126 = scmp.eq.s32.totalorder %s20, 1
    %p127 = por %p125, %p126
    %p129 = scmp.ne.s32.totalorder %s114, %s128
    %p130 = scmp.eq.s32.totalorder %s20, 0
    %p131 = por %p129, %p130
    %s133 = sadd.s32 %s132, 1
    %p136 = scmp.eq.s32.totalorder %s14, 1
    %p137 = scmp.ne.s32.totalorder %s132, %s134
    %p138 = scmp.eq.s32.totalorder %s14, 0
    %p139 = por %p137, %p138
    %p140 = scmp.ne.s32.totalorder %s132, %s134
    %p141 = scmp.eq.s32.totalorder %s19, 1
    %p142 = por %p140, %p141
    %p143 = scmp.ne.s32.totalorder %s134, %s135
    %p144 = scmp.eq.s32.totalorder %s19, 0
    %p145 = por %p143, %p144
    %p146 = scmp.ne.s32.totalorder %s134, %s135
    %p147 = scmp.eq.s32.totalorder %s20, 1
    %p148 = por %p146, %p147
    %p150 = scmp.ne.s32.totalorder %s135, %s149
    %p151 = scmp.eq.s32.totalorder %s20, 0
    %p152 = por %p150, %p151
    %s153 = ssub.s32 %s14, %s21
    %p154 = scmp.eq.s32.totalorder %s153, 0
    %s156 = sadd.s32 %s155, 1
    %s157 = scalar_select %p154, %s155, %s156
    %p160 = pneg %p154
    %p161 = scmp.eq.s32.totalorder %s14, 1
    %p162 = por %p160, %p161
    %p163 = scmp.ne.s32.totalorder %s155, %s158
    %p164 = scmp.eq.s32.totalorder %s14, 0
    %p165 = por %p163, %p164
    %p166 = scmp.ne.s32.totalorder %s155, %s158
    %p167 = scmp.eq.s32.totalorder %s19, 1
    %p168 = por %p166, %p167
    %p169 = scmp.ne.s32.totalorder %s158, %s159
    %p170 = scmp.eq.s32.totalorder %s19, 0
    %p171 = por %p169, %p170
    %p172 = scmp.ne.s32.totalorder %s158, %s159
    %p173 = scmp.eq.s32.totalorder %s20, 1
    %p174 = por %p172, %p173
    %p176 = scmp.ne.s32.totalorder %s159, %s175
    %p177 = scmp.eq.s32.totalorder %s20, 0
    %p178 = por %p176, %p177
    %s179 = ssub.s32 %s14, %s21
    %p180 = scmp.eq.s32.totalorder %s179, 0
    %s182 = sadd.s32 %s181, 1
    %s183 = scalar_select %p180, %s181, %s182
    %p186 = pneg %p180
    %p187 = scmp.eq.s32.totalorder %s14, 1
    %p188 = por %p186, %p187
    %p189 = scmp.ne.s32.totalorder %s181, %s184
    %p190 = scmp.eq.s32.totalorder %s14, 0
    %p191 = por %p189, %p190
    %p192 = scmp.ne.s32.totalorder %s181, %s184
    %p193 = scmp.eq.s32.totalorder %s19, 1
    %p194 = por %p192, %p193
    %p195 = scmp.ne.s32.totalorder %s184, %s185
    %p196 = scmp.eq.s32.totalorder %s19, 0
    %p197 = por %p195, %p196
    %p198 = scmp.ne.s32.totalorder %s184, %s185
    %p199 = scmp.eq.s32.totalorder %s20, 1
    %p200 = por %p198, %p199
    %p202 = scmp.ne.s32.totalorder %s185, %s201
    %p203 = scmp.eq.s32.totalorder %s20, 0
    %p204 = por %p202, %p203
    %p205 = scmp.le.s32.totalorder 1, %s14
    %p206 = scmp.lt.s32.totalorder %s14, 3
    %p207 = pnand %p205, %p206
    %p208 = pneg %p207
    // Predicated region
    $region9: #{dog_model_forward.4} parent=5 // pred_check
      _
    $region10: #{dog_model_forward.4} parent=5 // pred_check_branch
      %210 = sbr.rel (%p207) target = $region12
    $region11: #{dog_model_forward.4} parent=5 // pred_region
      %s211 = ssub.s32 %s14, 1
      // Predicated region
      $region13: #{dog_model_forward.4} parent=11 // pred_check
        %p212 = pneg %p61
      $region14: #{dog_model_forward.4} parent=11 // pred_check_branch
        %214 = sbr.rel (%p212) target = $region16
      $region15: #{dog_model_forward.4} parent=11 // pred_region
        _
      $region16: #{dog_model_forward.4} parent=11 // pred_fallthru
        _
      // Predicated region
      $region17: #{dog_model_forward.4} parent=11 // pred_check
        %p215 = pneg %p82
      $region18: #{dog_model_forward.4} parent=11 // pred_check_branch
        %217 = sbr.rel (%p215) target = $region20
      $region19: #{dog_model_forward.4} parent=11 // pred_region
        _
      $region20: #{dog_model_forward.4} parent=11 // pred_fallthru
        _
      // Predicated region
      $region21: #{dog_model_forward.4} parent=11 // pred_check
        %p218 = pneg %p103
      $region22: #{dog_model_forward.4} parent=11 // pred_check_branch
        %220 = sbr.rel (%p218) target = $region24
      $region23: #{dog_model_forward.4} parent=11 // pred_region
        _
      $region24: #{dog_model_forward.4} parent=11 // pred_fallthru
        _
      // Predicated region
      $region25: #{dog_model_forward.4} parent=11 // pred_check
        %p221 = pneg %p124
      $region26: #{dog_model_forward.4} parent=11 // pred_check_branch
        %223 = sbr.rel (%p221) target = $region28
      $region27: #{dog_model_forward.4} parent=11 // pred_region
        _
      $region28: #{dog_model_forward.4} parent=11 // pred_fallthru
        _
      // Predicated region
      $region29: #{dog_model_forward.4} parent=11 // pred_check
        %p224 = pneg %p145
      $region30: #{dog_model_forward.4} parent=11 // pred_check_branch
        %226 = sbr.rel (%p224) target = $region32
      $region31: #{dog_model_forward.4} parent=11 // pred_region
        _
      $region32: #{dog_model_forward.4} parent=11 // pred_fallthru
        _
    $region12: #{dog_model_forward.4} parent=5 // pred_fallthru
      _
    %p227 = scmp.lt.s32.totalorder %s14, 2
    // Predicated region
    $region33: #{dog_model_forward.4} parent=5 // pred_check
      %p228 = pneg %p227
    $region34: #{dog_model_forward.4} parent=5 // pred_check_branch
      %230 = sbr.rel (%p228) target = $region36
    $region35: #{dog_model_forward.4} parent=5 // pred_region
      // Predicated region
      $region37: #{dog_model_forward.4} parent=35 // pred_check
        %p231 = pneg %p34
      $region38: #{dog_model_forward.4} parent=35 // pred_check_branch
        %233 = sbr.rel (%p231) target = $region40
      $region39: #{dog_model_forward.4} parent=35 // pred_region
        %p234 = scmp.lt.s32.totalorder %s14, 1
        %s235 = scalar_select %p234, %s14, 1
        %s236 = smul.addr %s235, 2
        %s237 = smul.addr %s236, 8
        %s238 = scalar_lea.vmem %s0, %s237
      $region40: #{dog_model_forward.4} parent=35 // pred_fallthru
        _
    $region36: #{dog_model_forward.4} parent=5 // pred_fallthru
      _
    %p239 = scmp.le.s32.totalorder 1, %s14
    %p240 = scmp.lt.s32.totalorder %s14, 3
    %p241 = pnand %p239, %p240
    %p242 = pneg %p241
    // Predicated region
    $region41: #{dog_model_forward.4} parent=5 // pred_check
      _
    $region42: #{dog_model_forward.4} parent=5 // pred_check_branch
      %244 = sbr.rel (%p241) target = $region44
    $region43: #{dog_model_forward.4} parent=5 // pred_region
      %s245 = ssub.s32 %s14, 1
      %p246 = scmp.lt.s32.totalorder %s19, 1
      %s247 = scalar_select %p246, %s19, 1
      %s248 = smul.addr %s247, 2
      %s249 = smul.addr %s248, 8
      %s250 = scalar_lea.vmem %s0, %s249
      %p251 = pneg %p40
      %p252 = pneg %p37
      %p253 = pneg %p61
      %p254 = pneg %p58
      %p255 = pneg %p82
      %p256 = pneg %p79
      %p257 = pneg %p103
      %p258 = pneg %p100
      %p259 = pneg %p124
      %p260 = pneg %p121
      %p261 = pneg %p145
      %p262 = pneg %p142
      %p263 = pneg %p171
      %p264 = pneg %p168
      %p265 = scmp.lt.s32.totalorder %s19, 1
      %s266 = scalar_select %p265, %s19, 1
      %s267 = smul.addr %s266, 4
      %s268 = smul.addr %s267, 8
      %s269 = scalar_lea.vmem %s6, %s268
      %p270 = pneg %p197
      %p271 = pneg %p194
      %p272 = scmp.lt.s32.totalorder %s19, 1
      %s273 = scalar_select %p272, %s19, 1
      %s274 = smul.addr %s273, 4
      %s275 = smul.addr %s274, 8
      %s276 = scalar_lea.vmem %s7, %s275
      %p277 = scmp.lt.s32.totalorder %s19, 1
      %s278 = scalar_select %p277, %s19, 1
      %s279 = smul.addr %s278, 2
      %s280 = smul.addr %s279, 8
      %s281 = scalar_lea.vmem %s0, %s280
      %p282 = scmp.lt.s32.totalorder %s19, 1
      %s283 = scalar_select %p282, %s19, 1
      %s284 = smul.addr %s283, 4
      %s285 = smul.addr %s284, 8
      %s286 = scalar_lea.vmem %s6, %s285
      %p287 = scmp.lt.s32.totalorder %s19, 1
      %s288 = scalar_select %p287, %s19, 1
      %s289 = smul.addr %s288, 4
      %s290 = smul.addr %s289, 8
      %s291 = scalar_lea.vmem %s7, %s290
      %v292 = vld [vmem:[%s5] sm:$0x1]
      %vm293 = vcmp.gt.f32.partialorder %v292, 0.5
      %v294 = vld [vmem:[%s281] sm:$0xff]
      %v295 = vld [vmem:[%s281 + $0x8] sm:$0xf]
      %v296 = vld [vmem:[%s1] sm:$0xff]
      %v297 = vld [vmem:[%s1 + $0x8] sm:$0xff]
      %v298 = vld [vmem:[%s1 + $0x10] sm:$0xf]
      %v299 = vld [vmem:[%s2] sm:$0xff]
      %v300 = vld [vmem:[%s2 + $0x8] sm:$0xff]
      %v301 = vld [vmem:[%s2 + $0x10] sm:$0xf]
      %304 = vrot.lane.b32.xlu0 %v294, 11
      %v305 = vpop.permute.xlu0 %304
      %306 = vrot.lane.b32.xlu0 %v295, 11
      %v307 = vpop.permute.xlu0 %306
      %vm310 = vcmask 818264
      %311 = vst.msk [vmem:[#allocation2] sm:$0xff] %vm310, %v305
      %vm312 = vcmask 814168
      %313 = vst.msk [vmem:[#allocation2 + $0x8] sm:$0xf] %vm312, %v307
      %314 = vrot.lane.b32.xlu0 %v294, 10
      %v315 = vpop.permute.xlu0 %314
      %316 = vrot.lane.b32.xlu0 %v295, 10
      %v317 = vpop.permute.xlu0 %316
      %vm320 = vcmask 818256
      %321 = vst.msk [vmem:[#allocation2 + $0xc] sm:$0xff] %vm320, %v315
      %vm322 = vcmask 814160
      %323 = vst.msk [vmem:[#allocation2 + $0x14] sm:$0xf] %vm322, %v317
      %324 = vrot.lane.b32.xlu0 %v294, 9
      %v325 = vpop.permute.xlu0 %324
      %326 = vrot.lane.b32.xlu0 %v295, 9
      %v327 = vpop.permute.xlu0 %326
      %vm330 = vcmask 818248
      %331 = vst.msk [vmem:[#allocation2 + $0x18] sm:$0xff] %vm330, %v325
      %vm332 = vcmask 814152
      %333 = vst.msk [vmem:[#allocation2 + $0x20] sm:$0xf] %vm332, %v327
      %334 = vrot.lane.b32.xlu0 %v294, 1
      %v335 = vpop.permute.xlu0 %334
      %336 = vrot.lane.b32.xlu0 %v295, 1
      %v337 = vpop.permute.xlu0 %336
      %vm340 = vcmask 818184
      %341 = vst.msk [vmem:[#allocation2 + $0x24] sm:$0xff] %vm340, %v335
      %vm342 = vcmask 814088
      %343 = vst.msk [vmem:[#allocation2 + $0x2c] sm:$0xf] %vm342, %v337
      %vm344 = vcmask 818176
      %345 = vst.msk [vmem:[#allocation2 + $0x30] sm:$0xff] %vm344, %v294
      %vm346 = vcmask 814080
      %347 = vst.msk [vmem:[#allocation2 + $0x38] sm:$0xf] %vm346, %v295
      %348 = vrot.lane.b32.xlu0 %v294, 127
      %v349 = vpop.permute.xlu0 %348
      %350 = vrot.lane.b32.xlu0 %v295, 127
      %v351 = vpop.permute.xlu0 %350
      %vm354 = vcmask 809984
      %355 = vst.msk [vmem:[#allocation2 + $0x3c] sm:$0xff] %vm354, %v349
      %vm356 = vcmask 805888
      %357 = vst.msk [vmem:[#allocation2 + $0x44] sm:$0xf] %vm356, %v351
      %358 = vrot.lane.b32.xlu0 %v294, 119
      %v359 = vpop.permute.xlu0 %358
      %360 = vrot.lane.b32.xlu0 %v295, 119
      %v361 = vpop.permute.xlu0 %360
      %vm364 = vcmask 744448
      %365 = vst.msk [vmem:[#allocation2 + $0x48] sm:$0xff] %vm364, %v359
      %vm366 = vcmask 740352
      %367 = vst.msk [vmem:[#allocation2 + $0x50] sm:$0xf] %vm366, %v361
      %368 = vrot.lane.b32.xlu0 %v294, 118
      %v369 = vpop.permute.xlu0 %368
      %370 = vrot.lane.b32.xlu0 %v295, 118
      %v371 = vpop.permute.xlu0 %370
      %vm374 = vcmask 736256
      %375 = vst.msk [vmem:[#allocation2 + $0x54] sm:$0xff] %vm374, %v369
      %vm376 = vcmask 732160
      %377 = vst.msk [vmem:[#allocation2 + $0x5c] sm:$0xf] %vm376, %v371
      %378 = vrot.lane.b32.xlu0 %v294, 117
      %v379 = vpop.permute.xlu0 %378
      %380 = vrot.lane.b32.xlu0 %v295, 117
      %v381 = vpop.permute.xlu0 %380
      %vm384 = vcmask 728064
      %385 = vst.msk [vmem:[#allocation2 + $0x60] sm:$0xff] %vm384, %v379
      %vm386 = vcmask 723968
      %387 = vst.msk [vmem:[#allocation2 + $0x68] sm:$0xf] %vm386, %v381
      %v388 = vld [vmem:[#allocation2] sm:$0xff]
      %v389 = vld [vmem:[#allocation2 + $0x8] sm:$0xff]
      %v390 = vld [vmem:[#allocation2 + $0x10] sm:$0xff]
      %v391 = vld [vmem:[#allocation2 + $0x18] sm:$0xff]
      %v392 = vld [vmem:[#allocation2 + $0x20] sm:$0xff]
      %v393 = vld [vmem:[#allocation2 + $0x28] sm:$0xff]
      %v394 = vld [vmem:[#allocation2 + $0x30] sm:$0xff]
      %v395 = vld [vmem:[#allocation2 + $0x38] sm:$0xff]
      %v396 = vld [vmem:[#allocation2 + $0x40] sm:$0xff]
      %v397 = vld [vmem:[#allocation2 + $0x48] sm:$0xff]
      %v398 = vld [vmem:[#allocation2 + $0x50] sm:$0xff]
      %v399 = vld [vmem:[#allocation2 + $0x58] sm:$0xff]
      %v400 = vld [vmem:[#allocation2 + $0x60] sm:$0xff]
      %v401 = vld [vmem:[#allocation2 + $0x68] sm:$0xf]
      %403 = vset.pattern.permute.xlu0 0
      %404 = vperm.xlu0 %403, %v299
      %v405 = vpop.permute.xlu0 %404
      %408 = vset.pattern.permute.xlu0 0
      %409 = vperm.xlu0 %408, %v300
      %v410 = vpop.permute.xlu0 %409
      %413 = vset.pattern.permute.xlu0 0
      %414 = vperm.xlu0 %413, %v301
      %v415 = vpop.permute.xlu0 %414
      %vm417 = vcmask 883712
      %v419 = vsel %vm417, %v296, 0
      %v422 = vsel %vm417, %v297, 0
      %v425 = vsel %vm417, %v298, 0
      %vm427 = vcmask 1043456
      %v429 = vsel %vm427, %v401, 0
      %431 = vmatprep.subr.mxu0 0.0
      %432 = vmatpush1.msra.mxu0 %v388
      %433 = vmatprep.subr.mxu0 0.0
      %434 = vmatpush1.msra.mxu0 %v389
      %435 = vmatprep.subr.mxu0 0.0
      %436 = vmatpush1.msra.mxu0 %v390
      %437 = vmatprep.subr.mxu0 0.0
      %438 = vmatpush1.msra.mxu0 %v391
      %439 = vmatprep.subr.mxu0 0.0
      %440 = vmatpush1.msra.mxu0 %v392
      %441 = vmatprep.subr.mxu0 0.0
      %442 = vmatpush1.msra.mxu0 %v393
      %443 = vmatprep.subr.mxu0 0.0
      %444 = vmatpush1.msra.mxu0 %v394
      %445 = vmatprep.subr.mxu0 0.0
      %446 = vmatpush1.msra.mxu0 %v395
      %447 = vmatprep.subr.mxu0 0.0
      %448 = vmatpush1.msra.mxu0 %v396
      %449 = vmatprep.subr.mxu0 0.0
      %450 = vmatpush1.msra.mxu0 %v397
      %451 = vmatprep.subr.mxu0 0.0
      %452 = vmatpush1.msra.mxu0 %v398
      %453 = vmatprep.subr.mxu0 0.0
      %454 = vmatpush1.msra.mxu0 %v399
      %455 = vmatprep.subr.mxu0 0.0
      %456 = vmatpush1.msra.mxu0 %v400
      %457 = vmatprep.subr.mxu0 0.0
      %458 = vmatpush1.msra.mxu0 %v429
      %459 = vmatprep.subr.mxu0 0.0
      %460 = vmatpush1.msra.mxu0 0.0
      %461 = vmatprep.subr.mxu0 0.0
      %462 = vmatpush1.msra.mxu0 0.0
      %463 = vmatprep.subr.mxu0 0.0
      %464 = vmatpush1.msra.mxu0 0.0
      %465 = vmatprep.subr.mxu0 0.0
      %466 = vmatpush1.msra.mxu0 0.0
      %467 = vmatprep.subr.mxu0 0.0
      %468 = vmatpush1.msra.mxu0 0.0
      %469 = vmatprep.subr.mxu0 0.0
      %470 = vmatpush1.msra.mxu0 0.0
      %471 = vmatprep.subr.mxu0 0.0
      %472 = vmatpush1.msra.mxu0 0.0
      %473 = vmatprep.subr.mxu0 0.0
      %474 = vmatpush1.msra.mxu0 0.0
      %475 = vmatprep.subr.mxu0 0.0
      %476 = vmatpush1.msra.mxu0 0.0
      %477 = vmatprep.subr.mxu0 0.0
      %478 = vmatpush1.msra.mxu0 0.0
      %479 = vmatprep.subr.mxu0 0.0
      %480 = vmatpush1.msra.mxu0 0.0
      %481 = vmatprep.subr.mxu0 0.0
      %482 = vmatpush1.msra.mxu0 0.0
      %483 = vmatprep.subr.mxu0 0.0
      %484 = vmatpush1.msra.mxu0 0.0
      %485 = vmatprep.subr.mxu0 0.0
      %486 = vmatpush1.msra.mxu0 0.0
      %487 = vmatprep.subr.mxu0 0.0
      %488 = vmatpush1.msra.mxu0 0.0
      %489 = vmatprep.subr.mxu0 0.0
      %490 = vmatpush1.msra.mxu0 0.0
      %491 = vmatprep.subr.mxu0 0.0
      %492 = vmatpush1.msra.mxu0 0.0
      %493 = vmatprep.subr.mxu0 0.0
      %494 = vmatpush1.msra.mxu0 0.0
      %495 = vmatprep.mubr.f32.mxu0 0.0
      %496 = vmatmul.mubr.f32.gmra.mrb[0].mxu0 %v419
      %v497 = vpop.f32.mrb[0].mxu0
      %v498 = vadd.f32 %v405, %v497
      %v499 = vpop.f32.mrb[0].mxu0
      %500 = vmatprep.mubr.f32.mxu0 0.0
      %501 = vmatmul.mubr.f32.gmra.mrb[0].mxu0 %v422
      %v502 = vpop.f32.mrb[0].mxu0
      %v503 = vadd.f32 %v410, %v502
      %v504 = vpop.f32.mrb[0].mxu0
      %505 = vmatprep.mubr.f32.mxu0 0.0
      %506 = vmatmul.mubr.f32.gmra.mrb[0].mxu0 %v425
      %v507 = vpop.f32.mrb[0].mxu0
      %v508 = vadd.f32 %v415, %v507
      %v509 = vpop.f32.mrb[0].mxu0
      %510 = vdwg.mxu0
      %v511 = vsel %vm293, 1, 0
      %v512 = vlaneseq
      %v513 = vshrl.u32 %v512, 7
      %v514 = vsub.s32 0, %v513
      %v515 = vrot.slane %v511, %v514
      %vm516 = vcmp.eq.s32.totalorder %v515, 1
      %v517 = vsel %vm516, %v498, 0.0
      %v518 = vsel %vm516, %v503, 0.0
      %v519 = vsel %vm516, %v508, 0.0
      %v520 = vmax.f32 %v517, 0.0
      %v521 = vmax.f32 %v518, 0.0
      %v522 = vmax.f32 %v519, 0.0
      %v523 = vld [vmem:[%s3] sm:$0xff]
      %v524 = vld [vmem:[%s3 + $0x8] sm:$0xff]
      %v525 = vld [vmem:[%s3 + $0x10] sm:$0xff]
      %v526 = vld [vmem:[%s3 + $0x18] sm:$0xff]
      %v527 = vld [vmem:[%s3 + $0x20] sm:$0xff]
      %v528 = vld [vmem:[%s3 + $0x28] sm:$0xff]
      %v529 = vld [vmem:[%s3 + $0x30] sm:$0xff]
      %v530 = vld [vmem:[%s3 + $0x38] sm:$0xff]
      %v531 = vld [vmem:[%s4] sm:$0xff]
      %v532 = vld [vmem:[%s4 + $0x8] sm:$0xff]
      %v533 = vld [vmem:[%s4 + $0x10] sm:$0xff]
      %v534 = vld [vmem:[%s4 + $0x18] sm:$0xff]
      %538 = vrot.lane.b32.xlu0 %v520, 11
      %v539 = vpop.permute.xlu0 %538
      %540 = vrot.lane.b32.xlu0 %v521, 11
      %v541 = vpop.permute.xlu0 %540
      %542 = vrot.lane.b32.xlu0 %v522, 11
      %v543 = vpop.permute.xlu0 %542
      %547 = vst.msk [vmem:[#allocation3] sm:$0xff] %vm310, %v539
      %548 = vst.msk [vmem:[#allocation3 + $0x8] sm:$0xff] %vm310, %v541
      %549 = vst.msk [vmem:[#allocation3 + $0x10] sm:$0xf] %vm312, %v543
      %550 = vrot.lane.b32.xlu0 %v520, 10
      %v551 = vpop.permute.xlu0 %550
      %552 = vrot.lane.b32.xlu0 %v521, 10
      %v553 = vpop.permute.xlu0 %552
      %554 = vrot.lane.b32.xlu0 %v522, 10
      %v555 = vpop.permute.xlu0 %554
      %559 = vst.msk [vmem:[#allocation3 + $0x14] sm:$0xff] %vm320, %v551
      %560 = vst.msk [vmem:[#allocation3 + $0x1c] sm:$0xff] %vm320, %v553
      %561 = vst.msk [vmem:[#allocation3 + $0x24] sm:$0xf] %vm322, %v555
      %562 = vrot.lane.b32.xlu0 %v520, 9
      %v563 = vpop.permute.xlu0 %562
      %564 = vrot.lane.b32.xlu0 %v521, 9
      %v565 = vpop.permute.xlu0 %564
      %566 = vrot.lane.b32.xlu0 %v522, 9
      %v567 = vpop.permute.xlu0 %566
      %571 = vst.msk [vmem:[#allocation3 + $0x28] sm:$0xff] %vm330, %v563
      %572 = vst.msk [vmem:[#allocation3 + $0x30] sm:$0xff] %vm330, %v565
      %573 = vst.msk [vmem:[#allocation3 + $0x38] sm:$0xf] %vm332, %v567
      %574 = vrot.lane.b32.xlu0 %v520, 1
      %v575 = vpop.permute.xlu0 %574
      %576 = vrot.lane.b32.xlu0 %v521, 1
      %v577 = vpop.permute.xlu0 %576
      %578 = vrot.lane.b32.xlu0 %v522, 1
      %v579 = vpop.permute.xlu0 %578
      %583 = vst.msk [vmem:[#allocation3 + $0x3c] sm:$0xff] %vm340, %v575
      %584 = vst.msk [vmem:[#allocation3 + $0x44] sm:$0xff] %vm340, %v577
      %585 = vst.msk [vmem:[#allocation3 + $0x4c] sm:$0xf] %vm342, %v579
      %586 = vst.msk [vmem:[#allocation3 + $0x50] sm:$0xff] %vm344, %v520
      %587 = vst.msk [vmem:[#allocation3 + $0x58] sm:$0xff] %vm344, %v521
      %588 = vst.msk [vmem:[#allocation3 + $0x60] sm:$0xf] %vm346, %v522
      %589 = vrot.lane.b32.xlu0 %v520, 127
      %v590 = vpop.permute.xlu0 %589
      %591 = vrot.lane.b32.xlu0 %v521, 127
      %v592 = vpop.permute.xlu0 %591
      %593 = vrot.lane.b32.xlu0 %v522, 127
      %v594 = vpop.permute.xlu0 %593
      %598 = vst.msk [vmem:[#allocation3 + $0x64] sm:$0xff] %vm354, %v590
      %599 = vst.msk [vmem:[#allocation3 + $0x6c] sm:$0xff] %vm354, %v592
      %600 = vst.msk [vmem:[#allocation3 + $0x74] sm:$0xf] %vm356, %v594
      %601 = vrot.lane.b32.xlu0 %v520, 119
      %v602 = vpop.permute.xlu0 %601
      %603 = vrot.lane.b32.xlu0 %v521, 119
      %v604 = vpop.permute.xlu0 %603
      %605 = vrot.lane.b32.xlu0 %v522, 119
      %v606 = vpop.permute.xlu0 %605
      %610 = vst.msk [vmem:[#allocation3 + $0x78] sm:$0xff] %vm364, %v602
      %611 = vst.msk [vmem:[#allocation3 + $0x80] sm:$0xff] %vm364, %v604
      %612 = vst.msk [vmem:[#allocation3 + $0x88] sm:$0xf] %vm366, %v606
      %613 = vrot.lane.b32.xlu0 %v520, 118
      %v614 = vpop.permute.xlu0 %613
      %615 = vrot.lane.b32.xlu0 %v521, 118
      %v616 = vpop.permute.xlu0 %615
      %617 = vrot.lane.b32.xlu0 %v522, 118
      %v618 = vpop.permute.xlu0 %617
      %622 = vst.msk [vmem:[#allocation3 + $0x8c] sm:$0xff] %vm374, %v614
      %623 = vst.msk [vmem:[#allocation3 + $0x94] sm:$0xff] %vm374, %v616
      %624 = vst.msk [vmem:[#allocation3 + $0x9c] sm:$0xf] %vm376, %v618
      %625 = vrot.lane.b32.xlu0 %v520, 117
      %v626 = vpop.permute.xlu0 %625
      %627 = vrot.lane.b32.xlu0 %v521, 117
      %v628 = vpop.permute.xlu0 %627
      %629 = vrot.lane.b32.xlu0 %v522, 117
      %v630 = vpop.permute.xlu0 %629
      %634 = vst.msk [vmem:[#allocation3 + $0xa0] sm:$0xff] %vm384, %v626
      %635 = vst.msk [vmem:[#allocation3 + $0xa8] sm:$0xff] %vm384, %v628
      %636 = vst.msk [vmem:[#allocation3 + $0xb0] sm:$0xf] %vm386, %v630
      %v637 = vld [vmem:[#allocation3] sm:$0xff]
      %v638 = vld [vmem:[#allocation3 + $0x8] sm:$0xff]
      %v639 = vld [vmem:[#allocation3 + $0x10] sm:$0xff]
      %v640 = vld [vmem:[#allocation3 + $0x18] sm:$0xff]
      %v641 = vld [vmem:[#allocation3 + $0x20] sm:$0xff]
      %v642 = vld [vmem:[#allocation3 + $0x28] sm:$0xff]
      %v643 = vld [vmem:[#allocation3 + $0x30] sm:$0xff]
      %v644 = vld [vmem:[#allocation3 + $0x38] sm:$0xff]
      %v645 = vld [vmem:[#allocation3 + $0x40] sm:$0xff]
      %v646 = vld [vmem:[#allocation3 + $0x48] sm:$0xff]
      %v647 = vld [vmem:[#allocation3 + $0x50] sm:$0xff]
      %v648 = vld [vmem:[#allocation3 + $0x58] sm:$0xff]
      %v649 = vld [vmem:[#allocation3 + $0x60] sm:$0xff]
      %v650 = vld [vmem:[#allocation3 + $0x68] sm:$0xff]
      %v651 = vld [vmem:[#allocation3 + $0x70] sm:$0xff]
      %v652 = vld [vmem:[#allocation3 + $0x78] sm:$0xff]
      %v653 = vld [vmem:[#allocation3 + $0x80] sm:$0xff]
      %v654 = vld [vmem:[#allocation3 + $0x88] sm:$0xff]
      %v655 = vld [vmem:[#allocation3 + $0x90] sm:$0xff]
      %v656 = vld [vmem:[#allocation3 + $0x98] sm:$0xff]
      %v657 = vld [vmem:[#allocation3 + $0xa0] sm:$0xff]
      %v658 = vld [vmem:[#allocation3 + $0xa8] sm:$0xff]
      %v659 = vld [vmem:[#allocation3 + $0xb0] sm:$0xf]
      %661 = vset.pattern.permute.xlu0 0
      %662 = vperm.xlu0 %661, %v531
      %v663 = vpop.permute.xlu0 %662
      %666 = vset.pattern.permute.xlu0 0
      %667 = vperm.xlu0 %666, %v532
      %v668 = vpop.permute.xlu0 %667
      %671 = vset.pattern.permute.xlu0 0
      %672 = vperm.xlu0 %671, %v533
      %v673 = vpop.permute.xlu0 %672
      %676 = vset.pattern.permute.xlu0 0
      %677 = vperm.xlu0 %676, %v534
      %v678 = vpop.permute.xlu0 %677
      %vm680 = vcmask 424960
      %v682 = vsel %vm680, %v524, 0
      %v685 = vsel %vm680, %v526, 0
      %v688 = vsel %vm680, %v528, 0
      %v691 = vsel %vm680, %v530, 0
      %v694 = vsel %vm427, %v659, 0
      %696 = vmatprep.subr.mxu0 0.0
      %697 = vmatpush1.msra.mxu0 %v637
      %698 = vmatprep.subr.mxu0 0.0
      %699 = vmatpush1.msra.mxu0 %v638
      %700 = vmatprep.subr.mxu0 0.0
      %701 = vmatpush1.msra.mxu0 %v639
      %702 = vmatprep.subr.mxu0 0.0
      %703 = vmatpush1.msra.mxu0 %v640
      %704 = vmatprep.subr.mxu0 0.0
      %705 = vmatpush1.msra.mxu0 %v641
      %706 = vmatprep.subr.mxu0 0.0
      %707 = vmatpush1.msra.mxu0 %v642
      %708 = vmatprep.subr.mxu0 0.0
      %709 = vmatpush1.msra.mxu0 %v643
      %710 = vmatprep.subr.mxu0 0.0
      %711 = vmatpush1.msra.mxu0 %v644
      %712 = vmatprep.subr.mxu0 0.0
      %713 = vmatpush1.msra.mxu0 %v645
      %714 = vmatprep.subr.mxu0 0.0
      %715 = vmatpush1.msra.mxu0 %v646
      %716 = vmatprep.subr.mxu0 0.0
      %717 = vmatpush1.msra.mxu0 %v647
      %718 = vmatprep.subr.mxu0 0.0
      %719 = vmatpush1.msra.mxu0 %v648
      %720 = vmatprep.subr.mxu0 0.0
      %721 = vmatpush1.msra.mxu0 %v649
      %722 = vmatprep.subr.mxu0 0.0
      %723 = vmatpush1.msra.mxu0 %v650
      %724 = vmatprep.subr.mxu0 0.0
      %725 = vmatpush1.msra.mxu0 %v651
      %726 = vmatprep.subr.mxu0 0.0
      %727 = vmatpush1.msra.mxu0 %v652
      %728 = vmatprep.subr.mxu0 0.0
      %729 = vmatpush1.msra.mxu0 %v653
      %730 = vmatprep.subr.mxu0 0.0
      %731 = vmatpush1.msra.mxu0 %v654
      %732 = vmatprep.subr.mxu0 0.0
      %733 = vmatpush1.msra.mxu0 %v655
      %734 = vmatprep.subr.mxu0 0.0
      %735 = vmatpush1.msra.mxu0 %v656
      %736 = vmatprep.subr.mxu0 0.0
      %737 = vmatpush1.msra.mxu0 %v657
      %738 = vmatprep.subr.mxu0 0.0
      %739 = vmatpush1.msra.mxu0 %v658
      %740 = vmatprep.subr.mxu0 0.0
      %741 = vmatpush1.msra.mxu0 %v694
      %742 = vmatprep.subr.mxu0 0.0
      %743 = vmatpush1.msra.mxu0 0.0
      %744 = vmatprep.subr.mxu0 0.0
      %745 = vmatpush1.msra.mxu0 0.0
      %746 = vmatprep.subr.mxu0 0.0
      %747 = vmatpush1.msra.mxu0 0.0
      %748 = vmatprep.subr.mxu0 0.0
      %749 = vmatpush1.msra.mxu0 0.0
      %750 = vmatprep.subr.mxu0 0.0
      %751 = vmatpush1.msra.mxu0 0.0
      %752 = vmatprep.subr.mxu0 0.0
      %753 = vmatpush1.msra.mxu0 0.0
      %754 = vmatprep.subr.mxu0 0.0
      %755 = vmatpush1.msra.mxu0 0.0
      %756 = vmatprep.subr.mxu0 0.0
      %757 = vmatpush1.msra.mxu0 0.0
      %758 = vmatprep.subr.mxu0 0.0
      %759 = vmatpush1.msra.mxu0 0.0
      %760 = vmatprep.mubr.f32.mxu0 %v682
      %761 = vmatmul.mubr.f32.gmra.mrb[0].mxu0 %v523
      %v762 = vpop.f32.mrb[0].mxu0
      %v763 = vadd.f32 %v663, %v762
      %v764 = vpop.f32.mrb[0].mxu0
      %765 = vmatprep.mubr.f32.mxu0 %v685
      %766 = vmatmul.mubr.f32.gmra.mrb[0].mxu0 %v525
      %v767 = vpop.f32.mrb[0].mxu0
      %v768 = vadd.f32 %v668, %v767
      %v769 = vpop.f32.mrb[0].mxu0
      %770 = vmatprep.mubr.f32.mxu0 %v688
      %771 = vmatmul.mubr.f32.gmra.mrb[0].mxu0 %v527
      %v772 = vpop.f32.mrb[0].mxu0
      %v773 = vadd.f32 %v673, %v772
      %v774 = vpop.f32.mrb[0].mxu0
      %775 = vmatprep.mubr.f32.mxu0 %v691
      %776 = vmatmul.mubr.f32.gmra.mrb[0].mxu0 %v529
      %v777 = vpop.f32.mrb[0].mxu0
      %v778 = vadd.f32 %v678, %v777
      %v779 = vpop.f32.mrb[0].mxu0
      %780 = vdwg.mxu0
      %v781 = vsel %vm516, %v763, 0.0
      %v782 = vsel %vm516, %v768, 0.0
      %v783 = vsel %vm516, %v773, 0.0
      %v784 = vsel %vm516, %v778, 0.0
      %v785 = vsel %vm344, %v781, 0.0
      %786 = vadd.xlane.f32.xlu0 %v785
      %v787 = vpop.xlane.xlu0 %786
      %v788 = vsel %vm344, %v782, 0.0
      %789 = vadd.xlane.f32.xlu0 %v788
      %v790 = vpop.xlane.xlu0 %789
      %v791 = vsel %vm344, %v783, 0.0
      %792 = vadd.xlane.f32.xlu0 %v791
      %v793 = vpop.xlane.xlu0 %792
      %v794 = vsel %vm344, %v784, 0.0
      %795 = vadd.xlane.f32.xlu0 %v794
      %v796 = vpop.xlane.xlu0 %795
      %vm797 = vcmask 7168
      %798 = vst.msk [vmem:[%s291] sm:$0xff] %vm797, %v787
      %799 = vst.msk [vmem:[%s291 + $0x8] sm:$0xff] %vm797, %v790
      %800 = vst.msk [vmem:[%s291 + $0x10] sm:$0xff] %vm797, %v793
      %801 = vst.msk [vmem:[%s291 + $0x18] sm:$0xff] %vm797, %v796
      %v802 = vmul.f32 %v781, %v781
      %v803 = vmul.f32 %v782, %v782
      %v804 = vmul.f32 %v783, %v783
      %v805 = vmul.f32 %v784, %v784
      %v806 = vsel %vm344, %v802, 0.0
      %807 = vadd.xlane.f32.xlu0 %v806
      %v808 = vpop.xlane.xlu0 %807
      %v809 = vsel %vm344, %v803, 0.0
      %810 = vadd.xlane.f32.xlu0 %v809
      %v811 = vpop.xlane.xlu0 %810
      %v812 = vsel %vm344, %v804, 0.0
      %813 = vadd.xlane.f32.xlu0 %v812
      %v814 = vpop.xlane.xlu0 %813
      %v815 = vsel %vm344, %v805, 0.0
      %816 = vadd.xlane.f32.xlu0 %v815
      %v817 = vpop.xlane.xlu0 %816
      %vm818 = vcmask 15368
      %819 = vst.msk [vmem:[%s291] sm:$0xff] %vm818, %v808
      %820 = vst.msk [vmem:[%s291 + $0x8] sm:$0xff] %vm818, %v811
      %821 = vst.msk [vmem:[%s291 + $0x10] sm:$0xff] %vm818, %v814
      %822 = vst.msk [vmem:[%s291 + $0x18] sm:$0xff] %vm818, %v817
      %823 = vst.msk [vmem:[%s286] sm:$0xff] %vm344, %v781
      %824 = vst.msk [vmem:[%s286 + $0x8] sm:$0xff] %vm344, %v782
      %825 = vst.msk [vmem:[%s286 + $0x10] sm:$0xff] %vm344, %v783
      %826 = vst.msk [vmem:[%s286 + $0x18] sm:$0xff] %vm344, %v784
      %p827 = scmp.lt.s32.totalorder %s19, 1
      %s828 = scalar_select %p827, %s19, 1
      %s829 = smul.addr %s828, 4
      %s830 = smul.addr %s829, 8
      %s831 = scalar_lea.vmem %s6, %s830
      %p832 = scmp.lt.s32.totalorder %s19, 1
      %s833 = scalar_select %p832, %s19, 1
      %s834 = smul.addr %s833, 4
      %s835 = smul.addr %s834, 8
      %s836 = scalar_lea.vmem %s7, %s835
      // Predicated region
      $region45: #{dog_model_forward.4} parent=43 // pred_check
        %p837 = pneg %p168
      $region46: #{dog_model_forward.4} parent=43 // pred_check_branch
        %839 = sbr.rel (%p837) target = $region48
      $region47: #{dog_model_forward.4} parent=43 // pred_region
        _
      $region48: #{dog_model_forward.4} parent=43 // pred_fallthru
        _
      // Predicated region
      $region49: #{dog_model_forward.4} parent=43 // pred_check
        %p840 = pneg %p194
      $region50: #{dog_model_forward.4} parent=43 // pred_check_branch
        %842 = sbr.rel (%p840) target = $region52
      $region51: #{dog_model_forward.4} parent=43 // pred_region
        _
      $region52: #{dog_model_forward.4} parent=43 // pred_fallthru
        _
    $region44: #{dog_model_forward.4} parent=5 // pred_fallthru
      _
    %p843 = scmp.le.s32.totalorder 2, %s14
    // Predicated region
    $region53: #{dog_model_forward.4} parent=5 // pred_check
      %p844 = pneg %p843
    $region54: #{dog_model_forward.4} parent=5 // pred_check_branch
      %846 = sbr.rel (%p844) target = $region56
    $region55: #{dog_model_forward.4} parent=5 // pred_region
      %s847 = ssub.s32 %s14, 2
      // Predicated region
      $region57: #{dog_model_forward.4} parent=55 // pred_check
        %p848 = pneg %p174
      $region58: #{dog_model_forward.4} parent=55 // pred_check_branch
        %850 = sbr.rel (%p848) target = $region60
      $region59: #{dog_model_forward.4} parent=55 // pred_region
        %p851 = scmp.lt.s32.totalorder %s20, 1
        %s852 = scalar_select %p851, %s20, 1
        %s853 = smul.addr %s852, 4
        %s854 = smul.addr %s853, 8
        %s855 = scalar_lea.vmem %s6, %s854
      $region60: #{dog_model_forward.4} parent=55 // pred_fallthru
        _
      // Predicated region
      $region61: #{dog_model_forward.4} parent=55 // pred_check
        %p856 = pneg %p200
      $region62: #{dog_model_forward.4} parent=55 // pred_check_branch
        %858 = sbr.rel (%p856) target = $region64
      $region63: #{dog_model_forward.4} parent=55 // pred_region
        %p859 = scmp.lt.s32.totalorder %s20, 1
        %s860 = scalar_select %p859, %s20, 1
        %s861 = smul.addr %s860, 4
        %s862 = smul.addr %s861, 8
        %s863 = scalar_lea.vmem %s7, %s862
      $region64: #{dog_model_forward.4} parent=55 // pred_fallthru
        _
    $region56: #{dog_model_forward.4} parent=5 // pred_fallthru
      _
  $region6: #{dog_model_forward.4} parent=0 // loop_footer
    %s18 = sadd.s32 1, %s14
  $region7: #{dog_model_forward.4} parent=0 // loop_footer_branch
    %13 = sbr.rel target = $region3
  $region8: #{dog_model_forward.4} parent=0 // loop_exit
    _

</llo_original>
